<compile_context>
chip_gen: v7x
topology: tpu7x:2x2x1
jax: 0.10.0
libtpu: 0.0.40
codegen_flags: <defaults>
</compile_context>

<pallas_src>
import math
import functools

import numpy as np
import jax
import jax.numpy as jnp
from jax.experimental import pallas as pl
from jax.experimental.pallas import tpu as pltpu

LN_EPS = 1e-5


def _layernorm(x, w, b):
    mu = jnp.mean(x, axis=-1, keepdims=True)
    var = jnp.mean((x - mu) ** 2, axis=-1, keepdims=True)
    return (x - mu) * jax.lax.rsqrt(var + LN_EPS) * w + b


def _gelu_exact(x):
    # PyTorch nn.GELU() default = exact erf-based GELU.
    return 0.5 * x * (1.0 + jax.lax.erf(x * (1.0 / math.sqrt(2.0))))


def block_kernel(
    xf_ref,                 # (1, T,  C)  full sequence (resident across query tiles)
    xt_ref,                 # (1, TQ, C)  this query-row tile (residual path)
    ln1w_ref, ln1b_ref,
    wqkv_ref, bqkv_ref,     # fused QKV: (C, 3C), (1, 3C)   (scale folded into Q part)
    wp_ref, bp_ref,
    ln2w_ref, ln2b_ref,
    w1_ref, b1_ref, w2_ref, b2_ref,
    y_ref, att_ref,
    q_scr, k_scr, v_scr,    # VMEM (T, C) each, persist across the qi axis
    *, n_head, tq,
):
    T, C = q_scr.shape
    hd = C // n_head
    qi = pl.program_id(1)

    # ---- once per batch element: ln1 over the full sequence + fused QKV projection ----
    @pl.when(qi == 0)
    def _():
        h1 = _layernorm(xf_ref[0], ln1w_ref[...], ln1b_ref[...])                 # (T, C)
        qkv = jnp.dot(h1, wqkv_ref[...], preferred_element_type=jnp.float32) + bqkv_ref[...]
        q_scr[...] = qkv[:, :C]          # already scaled by 1/sqrt(hd) via the wrapper
        k_scr[...] = qkv[:, C:2 * C]
        v_scr[...] = qkv[:, 2 * C:]

    row0 = pl.multiple_of(qi * tq, tq)
    x_rows = xt_ref[0]                                                           # (tq, C)
    q_t = q_scr[pl.ds(row0, tq), :]                                              # (tq, C)
    k_all = k_scr[...]                                                           # (T, C)
    v_all = v_scr[...]                                                           # (T, C)

    # causal mask for this query tile: global query row index vs key column
    rows = row0 + jax.lax.broadcasted_iota(jnp.int32, (tq, T), 0)
    cols = jax.lax.broadcasted_iota(jnp.int32, (tq, T), 1)
    causal = rows >= cols

    # ---- attention: per-head scores/softmax; project each head's context through its slice
    #      of Wproj and accumulate (no lane-dim concat) ----
    y_acc = jnp.zeros((tq, C), jnp.float32)
    for h in range(n_head):
        sl = slice(h * hd, (h + 1) * hd)
        s = jnp.dot(q_t[:, sl], k_all[:, sl].T, preferred_element_type=jnp.float32)   # (tq, T)
        s = jnp.where(causal, s, -jnp.inf)
        m = jnp.max(s, axis=-1, keepdims=True)
        p = jnp.exp(s - m)
        att_h = p * pl.reciprocal(jnp.sum(p, axis=-1, keepdims=True))
        att_ref[0, h] = att_h                                                    # attn_drop = identity
        ctx_h = jnp.dot(att_h, v_all[:, sl], preferred_element_type=jnp.float32)      # (tq, hd)
        y_acc = y_acc + jnp.dot(ctx_h, wp_ref[sl, :], preferred_element_type=jnp.float32)

    # ---- output projection bias + residual (resid_drop = identity) ----
    x2 = x_rows + y_acc + bp_ref[...]

    # ---- ln2 + MLP(GELU) + residual (Dropout = identity) ----
    h2 = _layernorm(x2, ln2w_ref[...], ln2b_ref[...])
    ff = jnp.dot(h2, w1_ref[...], preferred_element_type=jnp.float32) + b1_ref[...]
    ff = _gelu_exact(ff)
    ff = jnp.dot(ff, w2_ref[...], preferred_element_type=jnp.float32) + b2_ref[...]
    y_ref[0] = (x2 + ff).astype(y_ref.dtype)


def block_forward(x, params, n_head):
    B, T, C = x.shape
    F = 4 * C
    hd = C // n_head
    assert C % n_head == 0
    scale = 1.0 / math.sqrt(hd)

    # Fused QKV weight/bias, with the attention scale folded into the Q projection.
    w_qkv = jnp.concatenate([params["wq"] * scale, params["wk"], params["wv"]], axis=1)  # (C, 3C)
    b_qkv = jnp.concatenate([params["bq"] * scale, params["bk"], params["bv"]], axis=1)  # (1, 3C)

    # Query-row tile size: tile long sequences (multiple of 128), keep short ones whole.
    TQ = 128 if (T % 128 == 0 and T > 128) else T
    NQ = T // TQ

    const2d = lambda shape: pl.BlockSpec(shape, lambda b, qi: (0, 0))

    in_specs = [
        pl.BlockSpec((1, T, C), lambda b, qi: (b, 0, 0)),     # x, full sequence (for K/V/Q build)
        pl.BlockSpec((1, TQ, C), lambda b, qi: (b, qi, 0)),   # x, query-row tile (residual)
        const2d((1, C)), const2d((1, C)),                     # ln1 w, b
        const2d((C, 3 * C)), const2d((1, 3 * C)),             # fused Wqkv, bqkv
        const2d((C, C)), const2d((1, C)),                     # Wproj, bproj
        const2d((1, C)), const2d((1, C)),                     # ln2 w, b
        const2d((C, F)), const2d((1, F)),                     # W1, b1
        const2d((F, C)), const2d((1, C)),                     # W2, b2
    ]
    out_specs = (
        pl.BlockSpec((1, TQ, C), lambda b, qi: (b, qi, 0)),
        pl.BlockSpec((1, n_head, TQ, T), lambda b, qi: (b, 0, qi, 0)),
    )
    out_shape = (
        jax.ShapeDtypeStruct((B, T, C), x.dtype),
        jax.ShapeDtypeStruct((B, n_head, T, T), jnp.float32),
    )
    scratch_shapes = [
        pltpu.VMEM((T, C), jnp.float32),   # Q (whole sequence)
        pltpu.VMEM((T, C), jnp.float32),   # K
        pltpu.VMEM((T, C), jnp.float32),   # V
    ]

    kernel = functools.partial(block_kernel, n_head=n_head, tq=TQ)
    return pl.pallas_call(
        kernel,
        grid=(B, NQ),
        in_specs=in_specs,
        out_specs=out_specs,
        out_shape=out_shape,
        scratch_shapes=scratch_shapes,
        compiler_params=pltpu.CompilerParams(
            dimension_semantics=("parallel", "arbitrary"),
            vmem_limit_bytes=64 * 1024 * 1024,   # sized for v7x's 64 MiB VMEM
        ),
    )(
        x, x,
        params["ln1_w"], params["ln1_b"],
        w_qkv, b_qkv,
        params["wp"], params["bp"],
        params["ln2_w"], params["ln2_b"],
        params["w1"], params["b1"], params["w2"], params["b2"],
    )


# -------------------- pure-JAX reference (for correctness check) --------------------
def ref_block(x, p, n_head):
    B, T, C = x.shape
    hd = C // n_head

    def ln(x, w, b):
        mu = x.mean(-1, keepdims=True)
        var = ((x - mu) ** 2).mean(-1, keepdims=True)
        return (x - mu) / jnp.sqrt(var + LN_EPS) * w + b

    res = x
    h1 = ln(x, p["ln1_w"], p["ln1_b"])
    q = h1 @ p["wq"] + p["bq"]
    k = h1 @ p["wk"] + p["bk"]
    v = h1 @ p["wv"] + p["bv"]
    q = q.reshape(B, T, n_head, hd).transpose(0, 2, 1, 3)
    k = k.reshape(B, T, n_head, hd).transpose(0, 2, 1, 3)
    v = v.reshape(B, T, n_head, hd).transpose(0, 2, 1, 3)
    att = jnp.einsum("bhqd,bhkd->bhqk", q, k) / math.sqrt(hd)
    mask = jnp.tril(jnp.ones((T, T), bool))
    att = jnp.where(mask[None, None], att, -jnp.inf)
    att = jax.nn.softmax(att, axis=-1)
    y = jnp.einsum("bhqk,bhkd->bhqd", att, v)
    y = y.transpose(0, 2, 1, 3).reshape(B, T, C)
    y = y @ p["wp"] + p["bp"]
    x2 = res + y
    h2 = ln(x2, p["ln2_w"], p["ln2_b"])
    ff = jax.nn.gelu(h2 @ p["w1"] + p["b1"], approximate=False)
    ff = ff @ p["w2"] + p["b2"]
    return x2 + ff, att


def init_params(key, C):
    F = 4 * C
    ks = jax.random.split(key, 8)
    s = 0.02
    return {
        "ln1_w": jnp.ones((1, C), jnp.float32),
        "ln1_b": jnp.zeros((1, C), jnp.float32),
        "wq": s * jax.random.normal(ks[0], (C, C), jnp.float32),
        "bq": s * jax.random.normal(ks[1], (1, C), jnp.float32),
        "wk": s * jax.random.normal(ks[2], (C, C), jnp.float32),
        "bk": s * jax.random.normal(ks[3], (1, C), jnp.float32),
        "wv": s * jax.random.normal(ks[4], (C, C), jnp.float32),
        "bv": s * jax.random.normal(ks[5], (1, C), jnp.float32),
        "wp": s * jax.random.normal(ks[6], (C, C), jnp.float32),
        "bp": jnp.zeros((1, C), jnp.float32),
        "ln2_w": jnp.ones((1, C), jnp.float32),
        "ln2_b": jnp.zeros((1, C), jnp.float32),
        "w1": s * jax.random.normal(ks[7], (C, F), jnp.float32),
        "b1": jnp.zeros((1, F), jnp.float32),
        "w2": s * jax.random.normal(jax.random.fold_in(key, 99), (F, C), jnp.float32),
        "b2": jnp.zeros((1, C), jnp.float32),
    }


if __name__ == "__main__":
    B, T, C, n_head = 2, 8, 32, 4   # block_size == T == 8
    key = jax.random.PRNGKey(0)
    kx, kp = jax.random.split(key)
    x = jax.random.normal(kx, (B, T, C), jnp.float32)
    params = init_params(kp, C)

    y, att = block_forward(x, params, n_head)
    y = jax.block_until_ready(y)
    att = jax.block_until_ready(att)

    y_ref, att_ref = ref_block(x, params, n_head)
    assert np.allclose(np.asarray(y), np.asarray(y_ref), atol=1e-4, rtol=1e-4)
    assert np.allclose(np.asarray(att), np.asarray(att_ref), atol=1e-4, rtol=1e-4)

    print("KERNEL_OK")
</pallas_src>

<mosaic_0001>
module attributes {stable_mosaic.version = 11 : i64} {
  func.func @block_kernel(%arg0: i32, %arg1: i32, %arg2: memref<1x8x32xf32, #tpu.memory_space<vmem>>, %arg3: memref<1x8x32xf32, #tpu.memory_space<vmem>>, %arg4: memref<1x32xf32, #tpu.memory_space<vmem>>, %arg5: memref<1x32xf32, #tpu.memory_space<vmem>>, %arg6: memref<32x96xf32, #tpu.memory_space<vmem>>, %arg7: memref<1x96xf32, #tpu.memory_space<vmem>>, %arg8: memref<32x32xf32, #tpu.memory_space<vmem>>, %arg9: memref<1x32xf32, #tpu.memory_space<vmem>>, %arg10: memref<1x32xf32, #tpu.memory_space<vmem>>, %arg11: memref<1x32xf32, #tpu.memory_space<vmem>>, %arg12: memref<32x128xf32, #tpu.memory_space<vmem>>, %arg13: memref<1x128xf32, #tpu.memory_space<vmem>>, %arg14: memref<128x32xf32, #tpu.memory_space<vmem>>, %arg15: memref<1x32xf32, #tpu.memory_space<vmem>>, %arg16: memref<1x8x32xf32, #tpu.memory_space<vmem>>, %arg17: memref<1x4x8x8xf32, #tpu.memory_space<vmem>>, %arg18: memref<8x32xf32, #tpu.memory_space<vmem>>, %arg19: memref<8x32xf32, #tpu.memory_space<vmem>>, %arg20: memref<8x32xf32, #tpu.memory_space<vmem>>) attributes {dimension_semantics = [#tpu.dimension_semantics<parallel>, #tpu.dimension_semantics<arbitrary>], iteration_bounds = array<i64: 2, 1>, scalar_prefetch = 0 : i64, scratch_operands = 3 : i64, tpu.core_type = #tpu.core_type<tc>, window_params = [{transform_indices = @transform_0, window_bounds = array<i64: 1, 8, 32>}, {transform_indices = @transform_1, window_bounds = array<i64: 1, 8, 32>}, {pipeline_mode = #tpu.pipeline_mode<synchronous>, transform_indices = @transform_2, window_bounds = array<i64: 1, 32>}, {pipeline_mode = #tpu.pipeline_mode<synchronous>, transform_indices = @transform_3, window_bounds = array<i64: 1, 32>}, {pipeline_mode = #tpu.pipeline_mode<synchronous>, transform_indices = @transform_4, window_bounds = array<i64: 32, 96>}, {pipeline_mode = #tpu.pipeline_mode<synchronous>, transform_indices = @transform_5, window_bounds = array<i64: 1, 96>}, {pipeline_mode = #tpu.pipeline_mode<synchronous>, transform_indices = @transform_6, window_bounds = array<i64: 32, 32>}, {pipeline_mode = #tpu.pipeline_mode<synchronous>, transform_indices = @transform_7, window_bounds = array<i64: 1, 32>}, {pipeline_mode = #tpu.pipeline_mode<synchronous>, transform_indices = @transform_8, window_bounds = array<i64: 1, 32>}, {pipeline_mode = #tpu.pipeline_mode<synchronous>, transform_indices = @transform_9, window_bounds = array<i64: 1, 32>}, {pipeline_mode = #tpu.pipeline_mode<synchronous>, transform_indices = @transform_10, window_bounds = array<i64: 32, 128>}, {pipeline_mode = #tpu.pipeline_mode<synchronous>, transform_indices = @transform_11, window_bounds = array<i64: 1, 128>}, {pipeline_mode = #tpu.pipeline_mode<synchronous>, transform_indices = @transform_12, window_bounds = array<i64: 128, 32>}, {pipeline_mode = #tpu.pipeline_mode<synchronous>, transform_indices = @transform_13, window_bounds = array<i64: 1, 32>}, {transform_indices = @transform_14, window_bounds = array<i64: 1, 8, 32>}, {transform_indices = @transform_15, window_bounds = array<i64: 1, 4, 8, 8>}]} {
    %c0_i32 = arith.constant 0 : i32
    %0 = arith.cmpi eq, %arg1, %c0_i32 : i32
    %1 = arith.extui %0 : i1 to i32
    %c0_i32_0 = arith.constant 0 : i32
    %2 = arith.cmpi ne, %1, %c0_i32_0 : i32
    scf.if %2 {
      %c0_77 = arith.constant 0 : index
      %c0_78 = arith.constant 0 : index
      %c0_79 = arith.constant 0 : index
      %163 = vector.load %arg2[%c0_77, %c0_78, %c0_79] : memref<1x8x32xf32, #tpu.memory_space<vmem>>, vector<1x8x32xf32>
      %164 = vector.shape_cast %163 : vector<1x8x32xf32> to vector<8x32xf32>
      %c0_80 = arith.constant 0 : index
      %c0_81 = arith.constant 0 : index
      %165 = vector.load %arg4[%c0_80, %c0_81] : memref<1x32xf32, #tpu.memory_space<vmem>>, vector<1x32xf32>
      %c0_82 = arith.constant 0 : index
      %c0_83 = arith.constant 0 : index
      %166 = vector.load %arg5[%c0_82, %c0_83] : memref<1x32xf32, #tpu.memory_space<vmem>>, vector<1x32xf32>
      %cst_84 = arith.constant dense<0.000000e+00> : vector<8xf32>
      %167 = vector.multi_reduction <add>, %164, %cst_84 [1] : vector<8x32xf32> to vector<8xf32>
      %168 = vector.shape_cast %167 : vector<8xf32> to vector<8x1xf32>
      %cst_85 = arith.constant 3.200000e+01 : f32
      %169 = vector.broadcast %cst_85 : f32 to vector<8x1xf32>
      %170 = arith.divf %168, %169 : vector<8x1xf32>
      %171 = vector.broadcast %170 : vector<8x1xf32> to vector<8x32xf32>
      %172 = arith.subf %164, %171 : vector<8x32xf32>
      %173 = arith.mulf %172, %172 : vector<8x32xf32>
      %cst_86 = arith.constant dense<0.000000e+00> : vector<8xf32>
      %174 = vector.multi_reduction <add>, %173, %cst_86 [1] : vector<8x32xf32> to vector<8xf32>
      %175 = vector.shape_cast %174 : vector<8xf32> to vector<8x1xf32>
      %cst_87 = arith.constant 3.200000e+01 : f32
      %176 = vector.broadcast %cst_87 : f32 to vector<8x1xf32>
      %177 = arith.divf %175, %176 : vector<8x1xf32>
      %178 = vector.broadcast %170 : vector<8x1xf32> to vector<8x32xf32>
      %179 = arith.subf %164, %178 : vector<8x32xf32>
      %cst_88 = arith.constant 9.99999974E-6 : f32
      %180 = vector.broadcast %cst_88 : f32 to vector<8x1xf32>
      %181 = arith.addf %177, %180 : vector<8x1xf32>
      %182 = math.rsqrt %181 : vector<8x1xf32>
      %183 = vector.broadcast %182 : vector<8x1xf32> to vector<8x32xf32>
      %184 = arith.mulf %179, %183 : vector<8x32xf32>
      %185 = vector.broadcast %165 : vector<1x32xf32> to vector<8x32xf32>
      %186 = arith.mulf %184, %185 : vector<8x32xf32>
      %187 = vector.broadcast %166 : vector<1x32xf32> to vector<8x32xf32>
      %188 = arith.addf %186, %187 : vector<8x32xf32>
      %c0_89 = arith.constant 0 : index
      %c0_90 = arith.constant 0 : index
      %189 = vector.load %arg6[%c0_89, %c0_90] : memref<32x96xf32, #tpu.memory_space<vmem>>, vector<32x96xf32>
      %cst_91 = arith.constant dense<0.000000e+00> : vector<8x96xf32>
      %190 = tpu.matmul %188, %189, %cst_91 {dimension_numbers = #tpu.dot_dimension_numbers<[1], [0], [0], [1], [0, 0, 1, 1], [], []>} : vector<8x32xf32>, vector<32x96xf32>, vector<8x96xf32> -> vector<8x96xf32>
      %c0_92 = arith.constant 0 : index
      %c0_93 = arith.constant 0 : index
      %191 = vector.load %arg7[%c0_92, %c0_93] : memref<1x96xf32, #tpu.memory_space<vmem>>, vector<1x96xf32>
      %192 = vector.broadcast %191 : vector<1x96xf32> to vector<8x96xf32>
      %193 = arith.addf %190, %192 : vector<8x96xf32>
      %194 = vector.extract_strided_slice %193 {offsets = [0, 0], sizes = [8, 32], strides = [1, 1]} : vector<8x96xf32> to vector<8x32xf32>
      %c0_94 = arith.constant 0 : index
      %c0_95 = arith.constant 0 : index
      %195 = vector.load %arg18[%c0_94, %c0_95] : memref<8x32xf32, #tpu.memory_space<vmem>>, vector<8x32xf32>
      tpu.vector_store %arg18[%c0_94, %c0_95], %194 {strides = array<i32>} : memref<8x32xf32, #tpu.memory_space<vmem>>, vector<8x32xf32>,
      %196 = vector.extract_strided_slice %193 {offsets = [0, 32], sizes = [8, 32], strides = [1, 1]} : vector<8x96xf32> to vector<8x32xf32>
      %c0_96 = arith.constant 0 : index
      %c0_97 = arith.constant 0 : index
      %197 = vector.load %arg19[%c0_96, %c0_97] : memref<8x32xf32, #tpu.memory_space<vmem>>, vector<8x32xf32>
      tpu.vector_store %arg19[%c0_96, %c0_97], %196 {strides = array<i32>} : memref<8x32xf32, #tpu.memory_space<vmem>>, vector<8x32xf32>,
      %198 = vector.extract_strided_slice %193 {offsets = [0, 64], sizes = [8, 32], strides = [1, 1]} : vector<8x96xf32> to vector<8x32xf32>
      %c0_98 = arith.constant 0 : index
      %c0_99 = arith.constant 0 : index
      %199 = vector.load %arg20[%c0_98, %c0_99] : memref<8x32xf32, #tpu.memory_space<vmem>>, vector<8x32xf32>
      tpu.vector_store %arg20[%c0_98, %c0_99], %198 {strides = array<i32>} : memref<8x32xf32, #tpu.memory_space<vmem>>, vector<8x32xf32>,
    } else {
    }
    %c8_i32 = arith.constant 8 : i32
    %3 = arith.muli %arg1, %c8_i32 : i32
    %4 = tpu.assume_multiple %3, 8 : i32
    %c0 = arith.constant 0 : index
    %c0_1 = arith.constant 0 : index
    %c0_2 = arith.constant 0 : index
    %5 = vector.load %arg3[%c0, %c0_1, %c0_2] : memref<1x8x32xf32, #tpu.memory_space<vmem>>, vector<1x8x32xf32>
    %6 = vector.shape_cast %5 : vector<1x8x32xf32> to vector<8x32xf32>
    %7 = arith.index_cast %4 : i32 to index
    %c0_3 = arith.constant 0 : index
    %8 = vector.load %arg18[%7, %c0_3] : memref<8x32xf32, #tpu.memory_space<vmem>>, vector<8x32xf32>
    %c0_4 = arith.constant 0 : index
    %c0_5 = arith.constant 0 : index
    %9 = vector.load %arg19[%c0_4, %c0_5] : memref<8x32xf32, #tpu.memory_space<vmem>>, vector<8x32xf32>
    %c0_6 = arith.constant 0 : index
    %c0_7 = arith.constant 0 : index
    %10 = vector.load %arg20[%c0_6, %c0_7] : memref<8x32xf32, #tpu.memory_space<vmem>>, vector<8x32xf32>
    %11 = tpu.iota {dimensions = array<i32: 0>} : vector<8x8xi32>
    %12 = vector.broadcast %4 : i32 to vector<8x8xi32>
    %13 = arith.addi %12, %11 : vector<8x8xi32>
    %14 = tpu.iota {dimensions = array<i32: 1>} : vector<8x8xi32>
    %15 = arith.cmpi sge, %13, %14 : vector<8x8xi32>
    %cst = arith.constant 0.000000e+00 : f32
    %16 = vector.broadcast %cst : f32 to vector<8x32xf32>
    %17 = vector.extract_strided_slice %8 {offsets = [0, 0], sizes = [8, 8], strides = [1, 1]} : vector<8x32xf32> to vector<8x8xf32>
    %18 = vector.extract_strided_slice %9 {offsets = [0, 0], sizes = [8, 8], strides = [1, 1]} : vector<8x32xf32> to vector<8x8xf32>
    %19 = tpu.transpose %18, [1, 0] : vector<8x8xf32> -> vector<8x8xf32>
    %cst_8 = arith.constant dense<0.000000e+00> : vector<8x8xf32>
    %20 = tpu.matmul %17, %19, %cst_8 {dimension_numbers = #tpu.dot_dimension_numbers<[1], [0], [0], [1], [0, 0, 1, 1], [], []>} : vector<8x8xf32>, vector<8x8xf32>, vector<8x8xf32> -> vector<8x8xf32>
    %cst_9 = arith.constant 0xFF800000 : f32
    %21 = vector.broadcast %cst_9 : f32 to vector<8x8xf32>
    %22 = arith.select %15, %20, %21 : vector<8x8xi1>, vector<8x8xf32>
    %cst_10 = arith.constant dense<0xFF800000> : vector<8xf32>
    %23 = vector.multi_reduction <maximumf>, %22, %cst_10 [1] : vector<8x8xf32> to vector<8xf32>
    %24 = vector.shape_cast %23 : vector<8xf32> to vector<8x1xf32>
    %25 = vector.broadcast %24 : vector<8x1xf32> to vector<8x8xf32>
    %26 = arith.subf %22, %25 : vector<8x8xf32>
    %27 = math.exp %26 : vector<8x8xf32>
    %cst_11 = arith.constant dense<0.000000e+00> : vector<8xf32>
    %28 = vector.multi_reduction <add>, %27, %cst_11 [1] : vector<8x8xf32> to vector<8xf32>
    %29 = vector.shape_cast %28 : vector<8xf32> to vector<8x1xf32>
    %30 = tpu.reciprocal %29 : vector<8x1xf32> -> vector<8x1xf32>
    %31 = vector.broadcast %30 : vector<8x1xf32> to vector<8x8xf32>
    %32 = arith.mulf %27, %31 : vector<8x8xf32>
    %c0_12 = arith.constant 0 : index
    %c0_13 = arith.constant 0 : index
    %c0_14 = arith.constant 0 : index
    %c0_15 = arith.constant 0 : index
    %33 = vector.load %arg17[%c0_12, %c0_13, %c0_14, %c0_15] : memref<1x4x8x8xf32, #tpu.memory_space<vmem>>, vector<1x1x8x8xf32>
    %34 = vector.shape_cast %33 : vector<1x1x8x8xf32> to vector<8x8xf32>
    %35 = vector.shape_cast %32 : vector<8x8xf32> to vector<1x1x8x8xf32>
    tpu.vector_store %arg17[%c0_12, %c0_13, %c0_14, %c0_15], %35 {strides = array<i32>} : memref<1x4x8x8xf32, #tpu.memory_space<vmem>>, vector<1x1x8x8xf32>,
    %36 = vector.extract_strided_slice %10 {offsets = [0, 0], sizes = [8, 8], strides = [1, 1]} : vector<8x32xf32> to vector<8x8xf32>
    %cst_16 = arith.constant dense<0.000000e+00> : vector<8x8xf32>
    %37 = tpu.matmul %32, %36, %cst_16 {dimension_numbers = #tpu.dot_dimension_numbers<[1], [0], [0], [1], [0, 0, 1, 1], [], []>} : vector<8x8xf32>, vector<8x8xf32>, vector<8x8xf32> -> vector<8x8xf32>
    %c0_17 = arith.constant 0 : index
    %c0_18 = arith.constant 0 : index
    %38 = vector.load %arg8[%c0_17, %c0_18] : memref<32x32xf32, #tpu.memory_space<vmem>>, vector<8x32xf32>
    %cst_19 = arith.constant dense<0.000000e+00> : vector<8x32xf32>
    %39 = tpu.matmul %37, %38, %cst_19 {dimension_numbers = #tpu.dot_dimension_numbers<[1], [0], [0], [1], [0, 0, 1, 1], [], []>} : vector<8x8xf32>, vector<8x32xf32>, vector<8x32xf32> -> vector<8x32xf32>
    %40 = arith.addf %16, %39 : vector<8x32xf32>
    %41 = vector.extract_strided_slice %8 {offsets = [0, 8], sizes = [8, 8], strides = [1, 1]} : vector<8x32xf32> to vector<8x8xf32>
    %42 = vector.extract_strided_slice %9 {offsets = [0, 8], sizes = [8, 8], strides = [1, 1]} : vector<8x32xf32> to vector<8x8xf32>
    %43 = tpu.transpose %42, [1, 0] : vector<8x8xf32> -> vector<8x8xf32>
    %cst_20 = arith.constant dense<0.000000e+00> : vector<8x8xf32>
    %44 = tpu.matmul %41, %43, %cst_20 {dimension_numbers = #tpu.dot_dimension_numbers<[1], [0], [0], [1], [0, 0, 1, 1], [], []>} : vector<8x8xf32>, vector<8x8xf32>, vector<8x8xf32> -> vector<8x8xf32>
    %cst_21 = arith.constant 0xFF800000 : f32
    %45 = vector.broadcast %cst_21 : f32 to vector<8x8xf32>
    %46 = arith.select %15, %44, %45 : vector<8x8xi1>, vector<8x8xf32>
    %cst_22 = arith.constant dense<0xFF800000> : vector<8xf32>
    %47 = vector.multi_reduction <maximumf>, %46, %cst_22 [1] : vector<8x8xf32> to vector<8xf32>
    %48 = vector.shape_cast %47 : vector<8xf32> to vector<8x1xf32>
    %49 = vector.broadcast %48 : vector<8x1xf32> to vector<8x8xf32>
    %50 = arith.subf %46, %49 : vector<8x8xf32>
    %51 = math.exp %50 : vector<8x8xf32>
    %cst_23 = arith.constant dense<0.000000e+00> : vector<8xf32>
    %52 = vector.multi_reduction <add>, %51, %cst_23 [1] : vector<8x8xf32> to vector<8xf32>
    %53 = vector.shape_cast %52 : vector<8xf32> to vector<8x1xf32>
    %54 = tpu.reciprocal %53 : vector<8x1xf32> -> vector<8x1xf32>
    %55 = vector.broadcast %54 : vector<8x1xf32> to vector<8x8xf32>
    %56 = arith.mulf %51, %55 : vector<8x8xf32>
    %c0_24 = arith.constant 0 : index
    %c1 = arith.constant 1 : index
    %c0_25 = arith.constant 0 : index
    %c0_26 = arith.constant 0 : index
    %57 = vector.load %arg17[%c0_24, %c1, %c0_25, %c0_26] : memref<1x4x8x8xf32, #tpu.memory_space<vmem>>, vector<1x1x8x8xf32>
    %58 = vector.shape_cast %57 : vector<1x1x8x8xf32> to vector<8x8xf32>
    %59 = vector.shape_cast %56 : vector<8x8xf32> to vector<1x1x8x8xf32>
    tpu.vector_store %arg17[%c0_24, %c1, %c0_25, %c0_26], %59 {strides = array<i32>} : memref<1x4x8x8xf32, #tpu.memory_space<vmem>>, vector<1x1x8x8xf32>,
    %60 = vector.extract_strided_slice %10 {offsets = [0, 8], sizes = [8, 8], strides = [1, 1]} : vector<8x32xf32> to vector<8x8xf32>
    %cst_27 = arith.constant dense<0.000000e+00> : vector<8x8xf32>
    %61 = tpu.matmul %56, %60, %cst_27 {dimension_numbers = #tpu.dot_dimension_numbers<[1], [0], [0], [1], [0, 0, 1, 1], [], []>} : vector<8x8xf32>, vector<8x8xf32>, vector<8x8xf32> -> vector<8x8xf32>
    %c8 = arith.constant 8 : index
    %c0_28 = arith.constant 0 : index
    %62 = vector.load %arg8[%c8, %c0_28] : memref<32x32xf32, #tpu.memory_space<vmem>>, vector<8x32xf32>
    %cst_29 = arith.constant dense<0.000000e+00> : vector<8x32xf32>
    %63 = tpu.matmul %61, %62, %cst_29 {dimension_numbers = #tpu.dot_dimension_numbers<[1], [0], [0], [1], [0, 0, 1, 1], [], []>} : vector<8x8xf32>, vector<8x32xf32>, vector<8x32xf32> -> vector<8x32xf32>
    %64 = arith.addf %40, %63 : vector<8x32xf32>
    %65 = vector.extract_strided_slice %8 {offsets = [0, 16], sizes = [8, 8], strides = [1, 1]} : vector<8x32xf32> to vector<8x8xf32>
    %66 = vector.extract_strided_slice %9 {offsets = [0, 16], sizes = [8, 8], strides = [1, 1]} : vector<8x32xf32> to vector<8x8xf32>
    %67 = tpu.transpose %66, [1, 0] : vector<8x8xf32> -> vector<8x8xf32>
    %cst_30 = arith.constant dense<0.000000e+00> : vector<8x8xf32>
    %68 = tpu.matmul %65, %67, %cst_30 {dimension_numbers = #tpu.dot_dimension_numbers<[1], [0], [0], [1], [0, 0, 1, 1], [], []>} : vector<8x8xf32>, vector<8x8xf32>, vector<8x8xf32> -> vector<8x8xf32>
    %cst_31 = arith.constant 0xFF800000 : f32
    %69 = vector.broadcast %cst_31 : f32 to vector<8x8xf32>
    %70 = arith.select %15, %68, %69 : vector<8x8xi1>, vector<8x8xf32>
    %cst_32 = arith.constant dense<0xFF800000> : vector<8xf32>
    %71 = vector.multi_reduction <maximumf>, %70, %cst_32 [1] : vector<8x8xf32> to vector<8xf32>
    %72 = vector.shape_cast %71 : vector<8xf32> to vector<8x1xf32>
    %73 = vector.broadcast %72 : vector<8x1xf32> to vector<8x8xf32>
    %74 = arith.subf %70, %73 : vector<8x8xf32>
    %75 = math.exp %74 : vector<8x8xf32>
    %cst_33 = arith.constant dense<0.000000e+00> : vector<8xf32>
    %76 = vector.multi_reduction <add>, %75, %cst_33 [1] : vector<8x8xf32> to vector<8xf32>
    %77 = vector.shape_cast %76 : vector<8xf32> to vector<8x1xf32>
    %78 = tpu.reciprocal %77 : vector<8x1xf32> -> vector<8x1xf32>
    %79 = vector.broadcast %78 : vector<8x1xf32> to vector<8x8xf32>
    %80 = arith.mulf %75, %79 : vector<8x8xf32>
    %c0_34 = arith.constant 0 : index
    %c2 = arith.constant 2 : index
    %c0_35 = arith.constant 0 : index
    %c0_36 = arith.constant 0 : index
    %81 = vector.load %arg17[%c0_34, %c2, %c0_35, %c0_36] : memref<1x4x8x8xf32, #tpu.memory_space<vmem>>, vector<1x1x8x8xf32>
    %82 = vector.shape_cast %81 : vector<1x1x8x8xf32> to vector<8x8xf32>
    %83 = vector.shape_cast %80 : vector<8x8xf32> to vector<1x1x8x8xf32>
    tpu.vector_store %arg17[%c0_34, %c2, %c0_35, %c0_36], %83 {strides = array<i32>} : memref<1x4x8x8xf32, #tpu.memory_space<vmem>>, vector<1x1x8x8xf32>,
    %84 = vector.extract_strided_slice %10 {offsets = [0, 16], sizes = [8, 8], strides = [1, 1]} : vector<8x32xf32> to vector<8x8xf32>
    %cst_37 = arith.constant dense<0.000000e+00> : vector<8x8xf32>
    %85 = tpu.matmul %80, %84, %cst_37 {dimension_numbers = #tpu.dot_dimension_numbers<[1], [0], [0], [1], [0, 0, 1, 1], [], []>} : vector<8x8xf32>, vector<8x8xf32>, vector<8x8xf32> -> vector<8x8xf32>
    %c16 = arith.constant 16 : index
    %c0_38 = arith.constant 0 : index
    %86 = vector.load %arg8[%c16, %c0_38] : memref<32x32xf32, #tpu.memory_space<vmem>>, vector<8x32xf32>
    %cst_39 = arith.constant dense<0.000000e+00> : vector<8x32xf32>
    %87 = tpu.matmul %85, %86, %cst_39 {dimension_numbers = #tpu.dot_dimension_numbers<[1], [0], [0], [1], [0, 0, 1, 1], [], []>} : vector<8x8xf32>, vector<8x32xf32>, vector<8x32xf32> -> vector<8x32xf32>
    %88 = arith.addf %64, %87 : vector<8x32xf32>
    %89 = vector.extract_strided_slice %8 {offsets = [0, 24], sizes = [8, 8], strides = [1, 1]} : vector<8x32xf32> to vector<8x8xf32>
    %90 = vector.extract_strided_slice %9 {offsets = [0, 24], sizes = [8, 8], strides = [1, 1]} : vector<8x32xf32> to vector<8x8xf32>
    %91 = tpu.transpose %90, [1, 0] : vector<8x8xf32> -> vector<8x8xf32>
    %cst_40 = arith.constant dense<0.000000e+00> : vector<8x8xf32>
    %92 = tpu.matmul %89, %91, %cst_40 {dimension_numbers = #tpu.dot_dimension_numbers<[1], [0], [0], [1], [0, 0, 1, 1], [], []>} : vector<8x8xf32>, vector<8x8xf32>, vector<8x8xf32> -> vector<8x8xf32>
    %cst_41 = arith.constant 0xFF800000 : f32
    %93 = vector.broadcast %cst_41 : f32 to vector<8x8xf32>
    %94 = arith.select %15, %92, %93 : vector<8x8xi1>, vector<8x8xf32>
    %cst_42 = arith.constant dense<0xFF800000> : vector<8xf32>
    %95 = vector.multi_reduction <maximumf>, %94, %cst_42 [1] : vector<8x8xf32> to vector<8xf32>
    %96 = vector.shape_cast %95 : vector<8xf32> to vector<8x1xf32>
    %97 = vector.broadcast %96 : vector<8x1xf32> to vector<8x8xf32>
    %98 = arith.subf %94, %97 : vector<8x8xf32>
    %99 = math.exp %98 : vector<8x8xf32>
    %cst_43 = arith.constant dense<0.000000e+00> : vector<8xf32>
    %100 = vector.multi_reduction <add>, %99, %cst_43 [1] : vector<8x8xf32> to vector<8xf32>
    %101 = vector.shape_cast %100 : vector<8xf32> to vector<8x1xf32>
    %102 = tpu.reciprocal %101 : vector<8x1xf32> -> vector<8x1xf32>
    %103 = vector.broadcast %102 : vector<8x1xf32> to vector<8x8xf32>
    %104 = arith.mulf %99, %103 : vector<8x8xf32>
    %c0_44 = arith.constant 0 : index
    %c3 = arith.constant 3 : index
    %c0_45 = arith.constant 0 : index
    %c0_46 = arith.constant 0 : index
    %105 = vector.load %arg17[%c0_44, %c3, %c0_45, %c0_46] : memref<1x4x8x8xf32, #tpu.memory_space<vmem>>, vector<1x1x8x8xf32>
    %106 = vector.shape_cast %105 : vector<1x1x8x8xf32> to vector<8x8xf32>
    %107 = vector.shape_cast %104 : vector<8x8xf32> to vector<1x1x8x8xf32>
    tpu.vector_store %arg17[%c0_44, %c3, %c0_45, %c0_46], %107 {strides = array<i32>} : memref<1x4x8x8xf32, #tpu.memory_space<vmem>>, vector<1x1x8x8xf32>,
    %108 = vector.extract_strided_slice %10 {offsets = [0, 24], sizes = [8, 8], strides = [1, 1]} : vector<8x32xf32> to vector<8x8xf32>
    %cst_47 = arith.constant dense<0.000000e+00> : vector<8x8xf32>
    %109 = tpu.matmul %104, %108, %cst_47 {dimension_numbers = #tpu.dot_dimension_numbers<[1], [0], [0], [1], [0, 0, 1, 1], [], []>} : vector<8x8xf32>, vector<8x8xf32>, vector<8x8xf32> -> vector<8x8xf32>
    %c24 = arith.constant 24 : index
    %c0_48 = arith.constant 0 : index
    %110 = vector.load %arg8[%c24, %c0_48] : memref<32x32xf32, #tpu.memory_space<vmem>>, vector<8x32xf32>
    %cst_49 = arith.constant dense<0.000000e+00> : vector<8x32xf32>
    %111 = tpu.matmul %109, %110, %cst_49 {dimension_numbers = #tpu.dot_dimension_numbers<[1], [0], [0], [1], [0, 0, 1, 1], [], []>} : vector<8x8xf32>, vector<8x32xf32>, vector<8x32xf32> -> vector<8x32xf32>
    %112 = arith.addf %88, %111 : vector<8x32xf32>
    %113 = arith.addf %6, %112 : vector<8x32xf32>
    %c0_50 = arith.constant 0 : index
    %c0_51 = arith.constant 0 : index
    %114 = vector.load %arg9[%c0_50, %c0_51] : memref<1x32xf32, #tpu.memory_space<vmem>>, vector<1x32xf32>
    %115 = vector.broadcast %114 : vector<1x32xf32> to vector<8x32xf32>
    %116 = arith.addf %113, %115 : vector<8x32xf32>
    %c0_52 = arith.constant 0 : index
    %c0_53 = arith.constant 0 : index
    %117 = vector.load %arg10[%c0_52, %c0_53] : memref<1x32xf32, #tpu.memory_space<vmem>>, vector<1x32xf32>
    %c0_54 = arith.constant 0 : index
    %c0_55 = arith.constant 0 : index
    %118 = vector.load %arg11[%c0_54, %c0_55] : memref<1x32xf32, #tpu.memory_space<vmem>>, vector<1x32xf32>
    %cst_56 = arith.constant dense<0.000000e+00> : vector<8xf32>
    %119 = vector.multi_reduction <add>, %116, %cst_56 [1] : vector<8x32xf32> to vector<8xf32>
    %120 = vector.shape_cast %119 : vector<8xf32> to vector<8x1xf32>
    %cst_57 = arith.constant 3.200000e+01 : f32
    %121 = vector.broadcast %cst_57 : f32 to vector<8x1xf32>
    %122 = arith.divf %120, %121 : vector<8x1xf32>
    %123 = vector.broadcast %122 : vector<8x1xf32> to vector<8x32xf32>
    %124 = arith.subf %116, %123 : vector<8x32xf32>
    %125 = arith.mulf %124, %124 : vector<8x32xf32>
    %cst_58 = arith.constant dense<0.000000e+00> : vector<8xf32>
    %126 = vector.multi_reduction <add>, %125, %cst_58 [1] : vector<8x32xf32> to vector<8xf32>
    %127 = vector.shape_cast %126 : vector<8xf32> to vector<8x1xf32>
    %cst_59 = arith.constant 3.200000e+01 : f32
    %128 = vector.broadcast %cst_59 : f32 to vector<8x1xf32>
    %129 = arith.divf %127, %128 : vector<8x1xf32>
    %130 = vector.broadcast %122 : vector<8x1xf32> to vector<8x32xf32>
    %131 = arith.subf %116, %130 : vector<8x32xf32>
    %cst_60 = arith.constant 9.99999974E-6 : f32
    %132 = vector.broadcast %cst_60 : f32 to vector<8x1xf32>
    %133 = arith.addf %129, %132 : vector<8x1xf32>
    %134 = math.rsqrt %133 : vector<8x1xf32>
    %135 = vector.broadcast %134 : vector<8x1xf32> to vector<8x32xf32>
    %136 = arith.mulf %131, %135 : vector<8x32xf32>
    %137 = vector.broadcast %117 : vector<1x32xf32> to vector<8x32xf32>
    %138 = arith.mulf %136, %137 : vector<8x32xf32>
    %139 = vector.broadcast %118 : vector<1x32xf32> to vector<8x32xf32>
    %140 = arith.addf %138, %139 : vector<8x32xf32>
    %c0_61 = arith.constant 0 : index
    %c0_62 = arith.constant 0 : index
    %141 = vector.load %arg12[%c0_61, %c0_62] : memref<32x128xf32, #tpu.memory_space<vmem>>, vector<32x128xf32>
    %cst_63 = arith.constant dense<0.000000e+00> : vector<8x128xf32>
    %142 = tpu.matmul %140, %141, %cst_63 {dimension_numbers = #tpu.dot_dimension_numbers<[1], [0], [0], [1], [0, 0, 1, 1], [], []>} : vector<8x32xf32>, vector<32x128xf32>, vector<8x128xf32> -> vector<8x128xf32>
    %c0_64 = arith.constant 0 : index
    %c0_65 = arith.constant 0 : index
    %143 = vector.load %arg13[%c0_64, %c0_65] : memref<1x128xf32, #tpu.memory_space<vmem>>, vector<1x128xf32>
    %144 = vector.broadcast %143 : vector<1x128xf32> to vector<8x128xf32>
    %145 = arith.addf %142, %144 : vector<8x128xf32>
    %cst_66 = arith.constant 5.000000e-01 : f32
    %146 = vector.broadcast %cst_66 : f32 to vector<8x128xf32>
    %147 = arith.mulf %146, %145 : vector<8x128xf32>
    %cst_67 = arith.constant 0.707106769 : f32
    %148 = vector.broadcast %cst_67 : f32 to vector<8x128xf32>
    %149 = arith.mulf %145, %148 : vector<8x128xf32>
    %150 = math.erf %149 : vector<8x128xf32>
    %cst_68 = arith.constant 1.000000e+00 : f32
    %151 = vector.broadcast %cst_68 : f32 to vector<8x128xf32>
    %152 = arith.addf %151, %150 : vector<8x128xf32>
    %153 = arith.mulf %147, %152 : vector<8x128xf32>
    %c0_69 = arith.constant 0 : index
    %c0_70 = arith.constant 0 : index
    %154 = vector.load %arg14[%c0_69, %c0_70] : memref<128x32xf32, #tpu.memory_space<vmem>>, vector<128x32xf32>
    %cst_71 = arith.constant dense<0.000000e+00> : vector<8x32xf32>
    %155 = tpu.matmul %153, %154, %cst_71 {dimension_numbers = #tpu.dot_dimension_numbers<[1], [0], [0], [1], [0, 0, 1, 1], [], []>} : vector<8x128xf32>, vector<128x32xf32>, vector<8x32xf32> -> vector<8x32xf32>
    %c0_72 = arith.constant 0 : index
    %c0_73 = arith.constant 0 : index
    %156 = vector.load %arg15[%c0_72, %c0_73] : memref<1x32xf32, #tpu.memory_space<vmem>>, vector<1x32xf32>
    %157 = vector.broadcast %156 : vector<1x32xf32> to vector<8x32xf32>
    %158 = arith.addf %155, %157 : vector<8x32xf32>
    %159 = arith.addf %116, %158 : vector<8x32xf32>
    %c0_74 = arith.constant 0 : index
    %c0_75 = arith.constant 0 : index
    %c0_76 = arith.constant 0 : index
    %160 = vector.load %arg16[%c0_74, %c0_75, %c0_76] : memref<1x8x32xf32, #tpu.memory_space<vmem>>, vector<1x8x32xf32>
    %161 = vector.shape_cast %160 : vector<1x8x32xf32> to vector<8x32xf32>
    %162 = vector.shape_cast %159 : vector<8x32xf32> to vector<1x8x32xf32>
    tpu.vector_store %arg16[%c0_74, %c0_75, %c0_76], %162 {strides = array<i32>} : memref<1x8x32xf32, #tpu.memory_space<vmem>>, vector<1x8x32xf32>,
    return
  }
  func.func @transform_0(%arg0: i32, %arg1: i32) -> (i32, i32, i32) {
    %c0_i32 = arith.constant 0 : i32
    %c0_i32_0 = arith.constant 0 : i32
    %c0_i32_1 = arith.constant 0 : i32
    return %arg0, %c0_i32, %c0_i32_0 : i32, i32, i32
  }
  func.func @transform_1(%arg0: i32, %arg1: i32) -> (i32, i32, i32) {
    %c0_i32 = arith.constant 0 : i32
    %c0_i32_0 = arith.constant 0 : i32
    return %arg0, %arg1, %c0_i32 : i32, i32, i32
  }
  func.func @transform_2(%arg0: i32, %arg1: i32) -> (i32, i32) {
    %c0_i32 = arith.constant 0 : i32
    %c0_i32_0 = arith.constant 0 : i32
    %c0_i32_1 = arith.constant 0 : i32
    return %c0_i32, %c0_i32_0 : i32, i32
  }
  func.func @transform_3(%arg0: i32, %arg1: i32) -> (i32, i32) {
    %c0_i32 = arith.constant 0 : i32
    %c0_i32_0 = arith.constant 0 : i32
    %c0_i32_1 = arith.constant 0 : i32
    return %c0_i32, %c0_i32_0 : i32, i32
  }
  func.func @transform_4(%arg0: i32, %arg1: i32) -> (i32, i32) {
    %c0_i32 = arith.constant 0 : i32
    %c0_i32_0 = arith.constant 0 : i32
    %c0_i32_1 = arith.constant 0 : i32
    return %c0_i32, %c0_i32_0 : i32, i32
  }
  func.func @transform_5(%arg0: i32, %arg1: i32) -> (i32, i32) {
    %c0_i32 = arith.constant 0 : i32
    %c0_i32_0 = arith.constant 0 : i32
    %c0_i32_1 = arith.constant 0 : i32
    return %c0_i32, %c0_i32_0 : i32, i32
  }
  func.func @transform_6(%arg0: i32, %arg1: i32) -> (i32, i32) {
    %c0_i32 = arith.constant 0 : i32
    %c0_i32_0 = arith.constant 0 : i32
    %c0_i32_1 = arith.constant 0 : i32
    return %c0_i32, %c0_i32_0 : i32, i32
  }
  func.func @transform_7(%arg0: i32, %arg1: i32) -> (i32, i32) {
    %c0_i32 = arith.constant 0 : i32
    %c0_i32_0 = arith.constant 0 : i32
    %c0_i32_1 = arith.constant 0 : i32
    return %c0_i32, %c0_i32_0 : i32, i32
  }
  func.func @transform_8(%arg0: i32, %arg1: i32) -> (i32, i32) {
    %c0_i32 = arith.constant 0 : i32
    %c0_i32_0 = arith.constant 0 : i32
    %c0_i32_1 = arith.constant 0 : i32
    return %c0_i32, %c0_i32_0 : i32, i32
  }
  func.func @transform_9(%arg0: i32, %arg1: i32) -> (i32, i32) {
    %c0_i32 = arith.constant 0 : i32
    %c0_i32_0 = arith.constant 0 : i32
    %c0_i32_1 = arith.constant 0 : i32
    return %c0_i32, %c0_i32_0 : i32, i32
  }
  func.func @transform_10(%arg0: i32, %arg1: i32) -> (i32, i32) {
    %c0_i32 = arith.constant 0 : i32
    %c0_i32_0 = arith.constant 0 : i32
    %c0_i32_1 = arith.constant 0 : i32
    return %c0_i32, %c0_i32_0 : i32, i32
  }
  func.func @transform_11(%arg0: i32, %arg1: i32) -> (i32, i32) {
    %c0_i32 = arith.constant 0 : i32
    %c0_i32_0 = arith.constant 0 : i32
    %c0_i32_1 = arith.constant 0 : i32
    return %c0_i32, %c0_i32_0 : i32, i32
  }
  func.func @transform_12(%arg0: i32, %arg1: i32) -> (i32, i32) {
    %c0_i32 = arith.constant 0 : i32
    %c0_i32_0 = arith.constant 0 : i32
    %c0_i32_1 = arith.constant 0 : i32
    return %c0_i32, %c0_i32_0 : i32, i32
  }
  func.func @transform_13(%arg0: i32, %arg1: i32) -> (i32, i32) {
    %c0_i32 = arith.constant 0 : i32
    %c0_i32_0 = arith.constant 0 : i32
    %c0_i32_1 = arith.constant 0 : i32
    return %c0_i32, %c0_i32_0 : i32, i32
  }
  func.func @transform_14(%arg0: i32, %arg1: i32) -> (i32, i32, i32) {
    %c0_i32 = arith.constant 0 : i32
    %c0_i32_0 = arith.constant 0 : i32
    return %arg0, %arg1, %c0_i32 : i32, i32, i32
  }
  func.func @transform_15(%arg0: i32, %arg1: i32) -> (i32, i32, i32, i32) {
    %c0_i32 = arith.constant 0 : i32
    %c0_i32_0 = arith.constant 0 : i32
    %c0_i32_1 = arith.constant 0 : i32
    return %arg0, %c0_i32, %arg1, %c0_i32_0 : i32, i32, i32, i32
  }
}

</mosaic_0001>

<llo_original>
// kernel: tpu_custom_call.1
$region0: #{tpu_custom_call.1}
  #allocation0 [shape = 'u32[]', space=smem, size = 0x4, offset = 0x4, fixed_abs, tag = 'smem constant byte address 0x4 - core index']
  #allocation1 [shape = 'u32[144,128]{1,0:T(1,128)}', space=vmem, size = 0x12000, scoped, tag = 'internal scratch']
  #allocation2 [shape = 'f32[8,32]{1,0:T(8,128)}', space=vmem, size = 0x1000, scoped, tag = 'scratch operand']
  #allocation3 [shape = 'f32[8,32]{1,0:T(8,128)}', space=vmem, size = 0x1000, scoped, tag = 'scratch operand']
  #allocation4 [shape = 'f32[8,32]{1,0:T(8,128)}', space=vmem, size = 0x1000, scoped, tag = 'scratch operand']
  %s0 = inlined_call_operand.hbm [shape: f32[2,8,32], index: 0, kind: input, shape index: {}]
  %s1 = inlined_call_operand.hbm [shape: f32[2,8,32], index: 1, kind: input, shape index: {}]
  %s2 = inlined_call_operand.hbm [shape: f32[1,32], index: 2, kind: input, shape index: {}]
  %s3 = inlined_call_operand.hbm [shape: f32[1,32], index: 3, kind: input, shape index: {}]
  %s4 = inlined_call_operand.hbm [shape: f32[32,96], index: 4, kind: input, shape index: {}]
  %s5 = inlined_call_operand.hbm [shape: f32[1,96], index: 5, kind: input, shape index: {}]
  %s6 = inlined_call_operand.hbm [shape: f32[32,32], index: 6, kind: input, shape index: {}]
  %s7 = inlined_call_operand.hbm [shape: f32[1,32], index: 7, kind: input, shape index: {}]
  %s8 = inlined_call_operand.hbm [shape: f32[1,32], index: 8, kind: input, shape index: {}]
  %s9 = inlined_call_operand.hbm [shape: f32[1,32], index: 9, kind: input, shape index: {}]
  %s10 = inlined_call_operand.hbm [shape: f32[32,128], index: 10, kind: input, shape index: {}]
  %s11 = inlined_call_operand.hbm [shape: f32[1,128], index: 11, kind: input, shape index: {}]
  %s12 = inlined_call_operand.hbm [shape: f32[128,32], index: 12, kind: input, shape index: {}]
  %s13 = inlined_call_operand.hbm [shape: f32[1,32], index: 13, kind: input, shape index: {}]
  %s14 = inlined_call_operand.hbm [shape: f32[2,8,32], index: 14, kind: output, shape index: {0}]
  %s15 = inlined_call_operand.hbm [shape: f32[2,4,8,8], index: 15, kind: output, shape index: {1}]
  %16 = xla_tuple %s14, %s15
  %s17 = sld [smem:[#allocation0]]
  $region157: #{tpu_custom_call.1} parent=0
    _
  %s19 = ssub.s32 1, %s17
  %s20 = scalar_select 0, %s19, %s17
  $region1: #{tpu_custom_call.1} parent=0
    #allocation5 [shape = 'u8[8192]{0}', space=vmem, size = 0x2000, scoped, tag = 'input window, operand 0']
    #allocation6 [shape = 's32[2]{0}', space=sflag, size = 0x8, scoped, tag = 'scoped memory for tpu_custom_call.1']
    #allocation7 [shape = 's32[2]{0}', space=sflag, size = 0x8, scoped, tag = 'scoped memory for tpu_custom_call.1']
    #allocation8 [shape = 'u8[8192]{0}', space=vmem, size = 0x2000, scoped, tag = 'input window, operand 1']
    #allocation9 [shape = 's32[2]{0}', space=sflag, size = 0x8, scoped, tag = 'scoped memory for tpu_custom_call.1']
    #allocation10 [shape = 'u8[512]{0}', space=vmem, size = 0x400, scoped, tag = 'input window, operand 2, single buffered']
    #allocation11 [shape = 'u8[512]{0}', space=vmem, size = 0x400, scoped, tag = 'input window, operand 3, single buffered']
    #allocation12 [shape = 's32[1]{0}', space=sflag, size = 0x4, scoped, tag = 'scoped memory for tpu_custom_call.1']
    #allocation13 [shape = 'u8[16384]{0}', space=vmem, size = 0x4000, scoped, tag = 'input window, operand 4, single buffered']
    #allocation14 [shape = 'u8[512]{0}', space=vmem, size = 0x400, scoped, tag = 'input window, operand 5, single buffered']
    #allocation15 [shape = 's32[1]{0}', space=sflag, size = 0x4, scoped, tag = 'scoped memory for tpu_custom_call.1']
    #allocation16 [shape = 'u8[16384]{0}', space=vmem, size = 0x4000, scoped, tag = 'input window, operand 6, single buffered']
    #allocation17 [shape = 'u8[512]{0}', space=vmem, size = 0x400, scoped, tag = 'input window, operand 7, single buffered']
    #allocation18 [shape = 's32[1]{0}', space=sflag, size = 0x4, scoped, tag = 'scoped memory for tpu_custom_call.1']
    #allocation19 [shape = 'u8[512]{0}', space=vmem, size = 0x400, scoped, tag = 'input window, operand 8, single buffered']
    #allocation20 [shape = 'u8[512]{0}', space=vmem, size = 0x400, scoped, tag = 'input window, operand 9, single buffered']
    #allocation21 [shape = 's32[1]{0}', space=sflag, size = 0x4, scoped, tag = 'scoped memory for tpu_custom_call.1']
    #allocation22 [shape = 'u8[16384]{0}', space=vmem, size = 0x4000, scoped, tag = 'input window, operand 10, single buffered']
    #allocation23 [shape = 'u8[512]{0}', space=vmem, size = 0x400, scoped, tag = 'input window, operand 11, single buffered']
    #allocation24 [shape = 's32[1]{0}', space=sflag, size = 0x4, scoped, tag = 'scoped memory for tpu_custom_call.1']
    #allocation25 [shape = 'u8[65536]{0}', space=vmem, size = 0x10000, scoped, tag = 'input window, operand 12, single buffered']
    #allocation26 [shape = 'u8[512]{0}', space=vmem, size = 0x400, scoped, tag = 'input window, operand 13, single buffered']
    #allocation27 [shape = 's32[1]{0}', space=sflag, size = 0x4, scoped, tag = 'scoped memory for tpu_custom_call.1']
    #allocation28 [shape = 'u8[8192]{0}', space=vmem, size = 0x2000, scoped, tag = 'output window, operand 0']
    #allocation29 [shape = 'u8[32768]{0}', space=vmem, size = 0x8000, scoped, tag = 'output window, operand 1']
    #allocation30 [shape = 's32[2]{0}', space=sflag, size = 0x8, scoped, tag = 'scoped memory for tpu_custom_call.1']
    %21 = vsyncpa [#allocation6], 0
    %s22 = scalar_lea.sflag [#allocation6], 1
    %23 = vsyncpa %s22, 0
    %24 = vsyncpa [#allocation9], 0
    %s25 = scalar_lea.sflag [#allocation9], 1
    %26 = vsyncpa %s25, 0
    %27 = vsyncpa [#allocation12], 0
    %28 = vsyncpa [#allocation15], 0
    %29 = vsyncpa [#allocation18], 0
    %30 = vsyncpa [#allocation21], 0
    %31 = vsyncpa [#allocation24], 0
    %32 = vsyncpa [#allocation27], 0
    %33 = vsyncpa [#allocation7], 0
    %s34 = scalar_lea.sflag [#allocation7], 1
    %35 = vsyncpa %s34, 0
    %36 = vsyncpa [#allocation30], 0
    %s37 = scalar_lea.sflag [#allocation30], 1
    %38 = vsyncpa %s37, 0
    loop: start=0, step=1, limit=4
    $region2: #{tpu_custom_call.1} parent=1 // loop_pre_header
      _
    $region3: #{tpu_custom_call.1} parent=1 // loop_header
      %s40 = sphi 0, %s44
      %p41 = scmp.ge.s32.totalorder %s40, 4
      %s47 = sphi 0, %s59
      %s48 = sphi 0, %s55
      %s49 = sphi 0, %s47
      %s50 = sphi 0, %s48
      %s51 = sphi 0, %s49
      %s52 = sphi 0, %s50
      %s62 = sphi 0, %s64
      %s65 = sphi 0, %s62
      %s66 = sphi 0, %s65
      %s82 = sphi 0, %s66
      %s90 = sphi 0, %s92
      %s93 = sphi 0, %s90
      %s94 = sphi 0, %s93
      %s110 = sphi 0, %s94
      %s114 = sphi 0, %s114
      %s116 = sphi 0, %s114
      %s117 = sphi 0, %s116
      %s131 = sphi 0, %s117
      %s135 = sphi 0, %s135
      %s137 = sphi 0, %s135
      %s138 = sphi 0, %s137
      %s152 = sphi 0, %s138
      %s156 = sphi 0, %s156
      %s158 = sphi 0, %s156
      %s159 = sphi 0, %s158
      %s173 = sphi 0, %s159
      %s177 = sphi 0, %s177
      %s179 = sphi 0, %s177
      %s180 = sphi 0, %s179
      %s194 = sphi 0, %s180
      %s198 = sphi 0, %s198
      %s200 = sphi 0, %s198
      %s201 = sphi 0, %s200
      %s215 = sphi 0, %s201
      %s219 = sphi 0, %s219
      %s221 = sphi 0, %s219
      %s222 = sphi 0, %s221
      %s236 = sphi 0, %s222
      %s240 = sphi 0, %s240
      %s242 = sphi 0, %s240
      %s243 = sphi 0, %s242
      %s257 = sphi 0, %s243
      %s261 = sphi 0, %s261
      %s263 = sphi 0, %s261
      %s264 = sphi 0, %s263
      %s278 = sphi 0, %s264
      %s282 = sphi 0, %s282
      %s284 = sphi 0, %s282
      %s285 = sphi 0, %s284
      %s299 = sphi 0, %s285
      %s303 = sphi 0, %s303
      %s305 = sphi 0, %s303
      %s306 = sphi 0, %s305
      %s320 = sphi 0, %s306
      %s324 = sphi 0, %s324
      %s326 = sphi 0, %s324
      %s327 = sphi 0, %s326
      %s341 = sphi 0, %s327
      %s345 = sphi 0, %s345
      %s347 = sphi 0, %s345
      %s348 = sphi 0, %s347
      %s362 = sphi 0, %s348
      %s370 = sphi 0, %s372
      %s373 = sphi 0, %s370
      %s374 = sphi 0, %s373
      %s390 = sphi 0, %s374
      %s398 = sphi 0, %s400
      %s401 = sphi 0, %s398
      %s402 = sphi 0, %s401
      %s418 = sphi 0, %s402
    $region4: #{tpu_custom_call.1} parent=1 // loop_header_branch
      %43 = sbr.rel (%p41) target = $region8
    $region5: #{tpu_custom_call.1} parent=1 // loop_body
      %s45 = ssub.s32 %s40, 1
      %s46 = ssub.s32 %s40, 2
      %s53 = sadd.s32 1, %s48
      %p54 = scmp.ge.s32.totalorder %s53, 1
      %s55 = scalar_select %p54, 0, %s53
      %s56 = sadd.s32 1, %s47
      %s57 = scalar_select %p54, %s56, %s47
      %p58 = scmp.ge.s32.totalorder %s57, 2
      %s59 = scalar_select %p58, 0, %s57
      %s60 = ssub.s32 %s47, %s59
      %p61 = scmp.eq.s32.totalorder %s60, 0
      %s63 = sadd.s32 %s62, 1
      %s64 = scalar_select %p61, %s62, %s63
      %p67 = pneg %p61
      %p68 = scmp.eq.s32.totalorder %s40, 1
      %p69 = por %p67, %p68
      %p70 = scmp.ne.s32.totalorder %s62, %s65
      %p71 = scmp.eq.s32.totalorder %s40, 0
      %p72 = por %p70, %p71
      %p73 = scmp.ne.s32.totalorder %s62, %s65
      %p74 = scmp.eq.s32.totalorder %s45, 1
      %p75 = por %p73, %p74
      %p76 = scmp.ne.s32.totalorder %s65, %s66
      %p77 = scmp.eq.s32.totalorder %s45, 0
      %p78 = por %p76, %p77
      %p79 = scmp.ne.s32.totalorder %s65, %s66
      %p80 = scmp.eq.s32.totalorder %s46, 1
      %p81 = por %p79, %p80
      %p83 = scmp.ne.s32.totalorder %s66, %s82
      %p84 = scmp.eq.s32.totalorder %s46, 0
      %p85 = por %p83, %p84
      %s86 = ssub.s32 %s47, %s59
      %s87 = ssub.s32 %s48, %s55
      %s88 = sor.u32 %s86, %s87
      %p89 = scmp.eq.s32.totalorder %s88, 0
      %s91 = sadd.s32 %s90, 1
      %s92 = scalar_select %p89, %s90, %s91
      %p95 = pneg %p89
      %p96 = scmp.eq.s32.totalorder %s40, 1
      %p97 = por %p95, %p96
      %p98 = scmp.ne.s32.totalorder %s90, %s93
      %p99 = scmp.eq.s32.totalorder %s40, 0
      %p100 = por %p98, %p99
      %p101 = scmp.ne.s32.totalorder %s90, %s93
      %p102 = scmp.eq.s32.totalorder %s45, 1
      %p103 = por %p101, %p102
      %p104 = scmp.ne.s32.totalorder %s93, %s94
      %p105 = scmp.eq.s32.totalorder %s45, 0
      %p106 = por %p104, %p105
      %p107 = scmp.ne.s32.totalorder %s93, %s94
      %p108 = scmp.eq.s32.totalorder %s46, 1
      %p109 = por %p107, %p108
      %p111 = scmp.ne.s32.totalorder %s94, %s110
      %p112 = scmp.eq.s32.totalorder %s46, 0
      %p113 = por %p111, %p112
      %s115 = sadd.s32 %s114, 1
      %p118 = scmp.eq.s32.totalorder %s40, 1
      %p119 = scmp.ne.s32.totalorder %s114, %s116
      %p120 = scmp.eq.s32.totalorder %s40, 0
      %p121 = por %p119, %p120
      %p122 = scmp.ne.s32.totalorder %s114, %s116
      %p123 = scmp.eq.s32.totalorder %s45, 1
      %p124 = por %p122, %p123
      %p125 = scmp.ne.s32.totalorder %s116, %s117
      %p126 = scmp.eq.s32.totalorder %s45, 0
      %p127 = por %p125, %p126
      %p128 = scmp.ne.s32.totalorder %s116, %s117
      %p129 = scmp.eq.s32.totalorder %s46, 1
      %p130 = por %p128, %p129
      %p132 = scmp.ne.s32.totalorder %s117, %s131
      %p133 = scmp.eq.s32.totalorder %s46, 0
      %p134 = por %p132, %p133
      %s136 = sadd.s32 %s135, 1
      %p139 = scmp.eq.s32.totalorder %s40, 1
      %p140 = scmp.ne.s32.totalorder %s135, %s137
      %p141 = scmp.eq.s32.totalorder %s40, 0
      %p142 = por %p140, %p141
      %p143 = scmp.ne.s32.totalorder %s135, %s137
      %p144 = scmp.eq.s32.totalorder %s45, 1
      %p145 = por %p143, %p144
      %p146 = scmp.ne.s32.totalorder %s137, %s138
      %p147 = scmp.eq.s32.totalorder %s45, 0
      %p148 = por %p146, %p147
      %p149 = scmp.ne.s32.totalorder %s137, %s138
      %p150 = scmp.eq.s32.totalorder %s46, 1
      %p151 = por %p149, %p150
      %p153 = scmp.ne.s32.totalorder %s138, %s152
      %p154 = scmp.eq.s32.totalorder %s46, 0
      %p155 = por %p153, %p154
      %s157 = sadd.s32 %s156, 1
      %p160 = scmp.eq.s32.totalorder %s40, 1
      %p161 = scmp.ne.s32.totalorder %s156, %s158
      %p162 = scmp.eq.s32.totalorder %s40, 0
      %p163 = por %p161, %p162
      %p164 = scmp.ne.s32.totalorder %s156, %s158
      %p165 = scmp.eq.s32.totalorder %s45, 1
      %p166 = por %p164, %p165
      %p167 = scmp.ne.s32.totalorder %s158, %s159
      %p168 = scmp.eq.s32.totalorder %s45, 0
      %p169 = por %p167, %p168
      %p170 = scmp.ne.s32.totalorder %s158, %s159
      %p171 = scmp.eq.s32.totalorder %s46, 1
      %p172 = por %p170, %p171
      %p174 = scmp.ne.s32.totalorder %s159, %s173
      %p175 = scmp.eq.s32.totalorder %s46, 0
      %p176 = por %p174, %p175
      %s178 = sadd.s32 %s177, 1
      %p181 = scmp.eq.s32.totalorder %s40, 1
      %p182 = scmp.ne.s32.totalorder %s177, %s179
      %p183 = scmp.eq.s32.totalorder %s40, 0
      %p184 = por %p182, %p183
      %p185 = scmp.ne.s32.totalorder %s177, %s179
      %p186 = scmp.eq.s32.totalorder %s45, 1
      %p187 = por %p185, %p186
      %p188 = scmp.ne.s32.totalorder %s179, %s180
      %p189 = scmp.eq.s32.totalorder %s45, 0
      %p190 = por %p188, %p189
      %p191 = scmp.ne.s32.totalorder %s179, %s180
      %p192 = scmp.eq.s32.totalorder %s46, 1
      %p193 = por %p191, %p192
      %p195 = scmp.ne.s32.totalorder %s180, %s194
      %p196 = scmp.eq.s32.totalorder %s46, 0
      %p197 = por %p195, %p196
      %s199 = sadd.s32 %s198, 1
      %p202 = scmp.eq.s32.totalorder %s40, 1
      %p203 = scmp.ne.s32.totalorder %s198, %s200
      %p204 = scmp.eq.s32.totalorder %s40, 0
      %p205 = por %p203, %p204
      %p206 = scmp.ne.s32.totalorder %s198, %s200
      %p207 = scmp.eq.s32.totalorder %s45, 1
      %p208 = por %p206, %p207
      %p209 = scmp.ne.s32.totalorder %s200, %s201
      %p210 = scmp.eq.s32.totalorder %s45, 0
      %p211 = por %p209, %p210
      %p212 = scmp.ne.s32.totalorder %s200, %s201
      %p213 = scmp.eq.s32.totalorder %s46, 1
      %p214 = por %p212, %p213
      %p216 = scmp.ne.s32.totalorder %s201, %s215
      %p217 = scmp.eq.s32.totalorder %s46, 0
      %p218 = por %p216, %p217
      %s220 = sadd.s32 %s219, 1
      %p223 = scmp.eq.s32.totalorder %s40, 1
      %p224 = scmp.ne.s32.totalorder %s219, %s221
      %p225 = scmp.eq.s32.totalorder %s40, 0
      %p226 = por %p224, %p225
      %p227 = scmp.ne.s32.totalorder %s219, %s221
      %p228 = scmp.eq.s32.totalorder %s45, 1
      %p229 = por %p227, %p228
      %p230 = scmp.ne.s32.totalorder %s221, %s222
      %p231 = scmp.eq.s32.totalorder %s45, 0
      %p232 = por %p230, %p231
      %p233 = scmp.ne.s32.totalorder %s221, %s222
      %p234 = scmp.eq.s32.totalorder %s46, 1
      %p235 = por %p233, %p234
      %p237 = scmp.ne.s32.totalorder %s222, %s236
      %p238 = scmp.eq.s32.totalorder %s46, 0
      %p239 = por %p237, %p238
      %s241 = sadd.s32 %s240, 1
      %p244 = scmp.eq.s32.totalorder %s40, 1
      %p245 = scmp.ne.s32.totalorder %s240, %s242
      %p246 = scmp.eq.s32.totalorder %s40, 0
      %p247 = por %p245, %p246
      %p248 = scmp.ne.s32.totalorder %s240, %s242
      %p249 = scmp.eq.s32.totalorder %s45, 1
      %p250 = por %p248, %p249
      %p251 = scmp.ne.s32.totalorder %s242, %s243
      %p252 = scmp.eq.s32.totalorder %s45, 0
      %p253 = por %p251, %p252
      %p254 = scmp.ne.s32.totalorder %s242, %s243
      %p255 = scmp.eq.s32.totalorder %s46, 1
      %p256 = por %p254, %p255
      %p258 = scmp.ne.s32.totalorder %s243, %s257
      %p259 = scmp.eq.s32.totalorder %s46, 0
      %p260 = por %p258, %p259
      %s262 = sadd.s32 %s261, 1
      %p265 = scmp.eq.s32.totalorder %s40, 1
      %p266 = scmp.ne.s32.totalorder %s261, %s263
      %p267 = scmp.eq.s32.totalorder %s40, 0
      %p268 = por %p266, %p267
      %p269 = scmp.ne.s32.totalorder %s261, %s263
      %p270 = scmp.eq.s32.totalorder %s45, 1
      %p271 = por %p269, %p270
      %p272 = scmp.ne.s32.totalorder %s263, %s264
      %p273 = scmp.eq.s32.totalorder %s45, 0
      %p274 = por %p272, %p273
      %p275 = scmp.ne.s32.totalorder %s263, %s264
      %p276 = scmp.eq.s32.totalorder %s46, 1
      %p277 = por %p275, %p276
      %p279 = scmp.ne.s32.totalorder %s264, %s278
      %p280 = scmp.eq.s32.totalorder %s46, 0
      %p281 = por %p279, %p280
      %s283 = sadd.s32 %s282, 1
      %p286 = scmp.eq.s32.totalorder %s40, 1
      %p287 = scmp.ne.s32.totalorder %s282, %s284
      %p288 = scmp.eq.s32.totalorder %s40, 0
      %p289 = por %p287, %p288
      %p290 = scmp.ne.s32.totalorder %s282, %s284
      %p291 = scmp.eq.s32.totalorder %s45, 1
      %p292 = por %p290, %p291
      %p293 = scmp.ne.s32.totalorder %s284, %s285
      %p294 = scmp.eq.s32.totalorder %s45, 0
      %p295 = por %p293, %p294
      %p296 = scmp.ne.s32.totalorder %s284, %s285
      %p297 = scmp.eq.s32.totalorder %s46, 1
      %p298 = por %p296, %p297
      %p300 = scmp.ne.s32.totalorder %s285, %s299
      %p301 = scmp.eq.s32.totalorder %s46, 0
      %p302 = por %p300, %p301
      %s304 = sadd.s32 %s303, 1
      %p307 = scmp.eq.s32.totalorder %s40, 1
      %p308 = scmp.ne.s32.totalorder %s303, %s305
      %p309 = scmp.eq.s32.totalorder %s40, 0
      %p310 = por %p308, %p309
      %p311 = scmp.ne.s32.totalorder %s303, %s305
      %p312 = scmp.eq.s32.totalorder %s45, 1
      %p313 = por %p311, %p312
      %p314 = scmp.ne.s32.totalorder %s305, %s306
      %p315 = scmp.eq.s32.totalorder %s45, 0
      %p316 = por %p314, %p315
      %p317 = scmp.ne.s32.totalorder %s305, %s306
      %p318 = scmp.eq.s32.totalorder %s46, 1
      %p319 = por %p317, %p318
      %p321 = scmp.ne.s32.totalorder %s306, %s320
      %p322 = scmp.eq.s32.totalorder %s46, 0
      %p323 = por %p321, %p322
      %s325 = sadd.s32 %s324, 1
      %p328 = scmp.eq.s32.totalorder %s40, 1
      %p329 = scmp.ne.s32.totalorder %s324, %s326
      %p330 = scmp.eq.s32.totalorder %s40, 0
      %p331 = por %p329, %p330
      %p332 = scmp.ne.s32.totalorder %s324, %s326
      %p333 = scmp.eq.s32.totalorder %s45, 1
      %p334 = por %p332, %p333
      %p335 = scmp.ne.s32.totalorder %s326, %s327
      %p336 = scmp.eq.s32.totalorder %s45, 0
      %p337 = por %p335, %p336
      %p338 = scmp.ne.s32.totalorder %s326, %s327
      %p339 = scmp.eq.s32.totalorder %s46, 1
      %p340 = por %p338, %p339
      %p342 = scmp.ne.s32.totalorder %s327, %s341
      %p343 = scmp.eq.s32.totalorder %s46, 0
      %p344 = por %p342, %p343
      %s346 = sadd.s32 %s345, 1
      %p349 = scmp.eq.s32.totalorder %s40, 1
      %p350 = scmp.ne.s32.totalorder %s345, %s347
      %p351 = scmp.eq.s32.totalorder %s40, 0
      %p352 = por %p350, %p351
      %p353 = scmp.ne.s32.totalorder %s345, %s347
      %p354 = scmp.eq.s32.totalorder %s45, 1
      %p355 = por %p353, %p354
      %p356 = scmp.ne.s32.totalorder %s347, %s348
      %p357 = scmp.eq.s32.totalorder %s45, 0
      %p358 = por %p356, %p357
      %p359 = scmp.ne.s32.totalorder %s347, %s348
      %p360 = scmp.eq.s32.totalorder %s46, 1
      %p361 = por %p359, %p360
      %p363 = scmp.ne.s32.totalorder %s348, %s362
      %p364 = scmp.eq.s32.totalorder %s46, 0
      %p365 = por %p363, %p364
      %s366 = ssub.s32 %s47, %s59
      %s367 = ssub.s32 %s48, %s55
      %s368 = sor.u32 %s366, %s367
      %p369 = scmp.eq.s32.totalorder %s368, 0
      %s371 = sadd.s32 %s370, 1
      %s372 = scalar_select %p369, %s370, %s371
      %p375 = pneg %p369
      %p376 = scmp.eq.s32.totalorder %s40, 1
      %p377 = por %p375, %p376
      %p378 = scmp.ne.s32.totalorder %s370, %s373
      %p379 = scmp.eq.s32.totalorder %s40, 0
      %p380 = por %p378, %p379
      %p381 = scmp.ne.s32.totalorder %s370, %s373
      %p382 = scmp.eq.s32.totalorder %s45, 1
      %p383 = por %p381, %p382
      %p384 = scmp.ne.s32.totalorder %s373, %s374
      %p385 = scmp.eq.s32.totalorder %s45, 0
      %p386 = por %p384, %p385
      %p387 = scmp.ne.s32.totalorder %s373, %s374
      %p388 = scmp.eq.s32.totalorder %s46, 1
      %p389 = por %p387, %p388
      %p391 = scmp.ne.s32.totalorder %s374, %s390
      %p392 = scmp.eq.s32.totalorder %s46, 0
      %p393 = por %p391, %p392
      %s394 = ssub.s32 %s47, %s59
      %s395 = ssub.s32 %s48, %s55
      %s396 = sor.u32 %s394, %s395
      %p397 = scmp.eq.s32.totalorder %s396, 0
      %s399 = sadd.s32 %s398, 1
      %s400 = scalar_select %p397, %s398, %s399
      %p403 = pneg %p397
      %p404 = scmp.eq.s32.totalorder %s40, 1
      %p405 = por %p403, %p404
      %p406 = scmp.ne.s32.totalorder %s398, %s401
      %p407 = scmp.eq.s32.totalorder %s40, 0
      %p408 = por %p406, %p407
      %p409 = scmp.ne.s32.totalorder %s398, %s401
      %p410 = scmp.eq.s32.totalorder %s45, 1
      %p411 = por %p409, %p410
      %p412 = scmp.ne.s32.totalorder %s401, %s402
      %p413 = scmp.eq.s32.totalorder %s45, 0
      %p414 = por %p412, %p413
      %p415 = scmp.ne.s32.totalorder %s401, %s402
      %p416 = scmp.eq.s32.totalorder %s46, 1
      %p417 = por %p415, %p416
      %p419 = scmp.ne.s32.totalorder %s402, %s418
      %p420 = scmp.eq.s32.totalorder %s46, 0
      %p421 = por %p419, %p420
      %p422 = scmp.le.s32.totalorder 1, %s40
      %p423 = scmp.lt.s32.totalorder %s40, 3
      %p424 = pnand %p422, %p423
      %p425 = pneg %p424
      // Predicated region
      $region9: #{tpu_custom_call.1} parent=5 // pred_check
        _
      $region10: #{tpu_custom_call.1} parent=5 // pred_check_branch
        %427 = sbr.rel (%p424) target = $region12
      $region11: #{tpu_custom_call.1} parent=5 // pred_region
        %s428 = ssub.s32 %s40, 1
        // Predicated region
        $region13: #{tpu_custom_call.1} parent=11 // pred_check
          %p429 = pneg %p127
        $region14: #{tpu_custom_call.1} parent=11 // pred_check_branch
          %431 = sbr.rel (%p429) target = $region16
        $region15: #{tpu_custom_call.1} parent=11 // pred_region
          %s433 = ssub.s32 16, 16
          %434 = vsyncadd [#allocation9], %s433
          %s436 = sshll.u32 [#allocation10], 4
          %s437 = int_to_ptr.vmem [resolvable:$true] %s436
          %439 = dma.hbm_to_vmem [thread:$0]  %s2, 16, %s437, [#allocation9]
        $region16: #{tpu_custom_call.1} parent=11 // pred_fallthru
          _
        // Predicated region
        $region17: #{tpu_custom_call.1} parent=11 // pred_check
          %p440 = pneg %p148
        $region18: #{tpu_custom_call.1} parent=11 // pred_check_branch
          %442 = sbr.rel (%p440) target = $region20
        $region19: #{tpu_custom_call.1} parent=11 // pred_region
          %s444 = ssub.s32 16, 16
          %445 = vsyncadd [#allocation12], %s444
          %s447 = sshll.u32 [#allocation11], 4
          %s448 = int_to_ptr.vmem [resolvable:$true] %s447
          %450 = dma.hbm_to_vmem [thread:$0]  %s3, 16, %s448, [#allocation12]
        $region20: #{tpu_custom_call.1} parent=11 // pred_fallthru
          _
        // Predicated region
        $region21: #{tpu_custom_call.1} parent=11 // pred_check
          %p451 = pneg %p169
        $region22: #{tpu_custom_call.1} parent=11 // pred_check_branch
          %453 = sbr.rel (%p451) target = $region24
        $region23: #{tpu_custom_call.1} parent=11 // pred_region
          %s455 = ssub.s32 512, 512
          %456 = vsyncadd [#allocation12], %s455
          %s457 = sshll.u32 [#allocation13], 4
          %s458 = int_to_ptr.vmem [resolvable:$true] %s457
          %463 = dma.hbm_to_vmem [thread:$0]  %s4, 512, %s458, [#allocation12], 128, 128, 8
        $region24: #{tpu_custom_call.1} parent=11 // pred_fallthru
          _
        // Predicated region
        $region25: #{tpu_custom_call.1} parent=11 // pred_check
          %p464 = pneg %p190
        $region26: #{tpu_custom_call.1} parent=11 // pred_check_branch
          %466 = sbr.rel (%p464) target = $region28
        $region27: #{tpu_custom_call.1} parent=11 // pred_region
          %s468 = ssub.s32 16, 16
          %469 = vsyncadd [#allocation15], %s468
          %s471 = sshll.u32 [#allocation14], 4
          %s472 = int_to_ptr.vmem [resolvable:$true] %s471
          %474 = dma.hbm_to_vmem [thread:$0]  %s5, 16, %s472, [#allocation15]
        $region28: #{tpu_custom_call.1} parent=11 // pred_fallthru
          _
        // Predicated region
        $region29: #{tpu_custom_call.1} parent=11 // pred_check
          %p475 = pneg %p211
        $region30: #{tpu_custom_call.1} parent=11 // pred_check_branch
          %477 = sbr.rel (%p475) target = $region32
        $region31: #{tpu_custom_call.1} parent=11 // pred_region
          %s479 = ssub.s32 512, 512
          %480 = vsyncadd [#allocation15], %s479
          %s481 = sshll.u32 [#allocation16], 4
          %s482 = int_to_ptr.vmem [resolvable:$true] %s481
          %487 = dma.hbm_to_vmem [thread:$0]  %s6, 512, %s482, [#allocation15], 128, 128, 8
        $region32: #{tpu_custom_call.1} parent=11 // pred_fallthru
          _
        // Predicated region
        $region33: #{tpu_custom_call.1} parent=11 // pred_check
          %p488 = pneg %p232
        $region34: #{tpu_custom_call.1} parent=11 // pred_check_branch
          %490 = sbr.rel (%p488) target = $region36
        $region35: #{tpu_custom_call.1} parent=11 // pred_region
          %s492 = ssub.s32 16, 16
          %493 = vsyncadd [#allocation18], %s492
          %s495 = sshll.u32 [#allocation17], 4
          %s496 = int_to_ptr.vmem [resolvable:$true] %s495
          %498 = dma.hbm_to_vmem [thread:$0]  %s7, 16, %s496, [#allocation18]
        $region36: #{tpu_custom_call.1} parent=11 // pred_fallthru
          _
        // Predicated region
        $region37: #{tpu_custom_call.1} parent=11 // pred_check
          %p499 = pneg %p253
        $region38: #{tpu_custom_call.1} parent=11 // pred_check_branch
          %501 = sbr.rel (%p499) target = $region40
        $region39: #{tpu_custom_call.1} parent=11 // pred_region
          %s503 = ssub.s32 16, 16
          %504 = vsyncadd [#allocation18], %s503
          %s506 = sshll.u32 [#allocation19], 4
          %s507 = int_to_ptr.vmem [resolvable:$true] %s506
          %509 = dma.hbm_to_vmem [thread:$0]  %s8, 16, %s507, [#allocation18]
        $region40: #{tpu_custom_call.1} parent=11 // pred_fallthru
          _
        // Predicated region
        $region41: #{tpu_custom_call.1} parent=11 // pred_check
          %p510 = pneg %p274
        $region42: #{tpu_custom_call.1} parent=11 // pred_check_branch
          %512 = sbr.rel (%p510) target = $region44
        $region43: #{tpu_custom_call.1} parent=11 // pred_region
          %s514 = ssub.s32 16, 16
          %515 = vsyncadd [#allocation21], %s514
          %s517 = sshll.u32 [#allocation20], 4
          %s518 = int_to_ptr.vmem [resolvable:$true] %s517
          %520 = dma.hbm_to_vmem [thread:$0]  %s9, 16, %s518, [#allocation21]
        $region44: #{tpu_custom_call.1} parent=11 // pred_fallthru
          _
        // Predicated region
        $region45: #{tpu_custom_call.1} parent=11 // pred_check
          %p521 = pneg %p295
        $region46: #{tpu_custom_call.1} parent=11 // pred_check_branch
          %523 = sbr.rel (%p521) target = $region48
        $region47: #{tpu_custom_call.1} parent=11 // pred_region
          %s525 = ssub.s32 512, 512
          %526 = vsyncadd [#allocation21], %s525
          %s527 = sshll.u32 [#allocation22], 4
          %s528 = int_to_ptr.vmem [resolvable:$true] %s527
          %533 = dma.hbm_to_vmem [thread:$0]  %s10, 512, %s528, [#allocation21], 128, 128, 8
        $region48: #{tpu_custom_call.1} parent=11 // pred_fallthru
          _
        // Predicated region
        $region49: #{tpu_custom_call.1} parent=11 // pred_check
          %p534 = pneg %p316
        $region50: #{tpu_custom_call.1} parent=11 // pred_check_branch
          %536 = sbr.rel (%p534) target = $region52
        $region51: #{tpu_custom_call.1} parent=11 // pred_region
          %s538 = ssub.s32 16, 16
          %539 = vsyncadd [#allocation24], %s538
          %s541 = sshll.u32 [#allocation23], 4
          %s542 = int_to_ptr.vmem [resolvable:$true] %s541
          %544 = dma.hbm_to_vmem [thread:$0]  %s11, 16, %s542, [#allocation24]
        $region52: #{tpu_custom_call.1} parent=11 // pred_fallthru
          _
        // Predicated region
        $region53: #{tpu_custom_call.1} parent=11 // pred_check
          %p545 = pneg %p337
        $region54: #{tpu_custom_call.1} parent=11 // pred_check_branch
          %547 = sbr.rel (%p545) target = $region56
        $region55: #{tpu_custom_call.1} parent=11 // pred_region
          %s549 = ssub.s32 2048, 2048
          %550 = vsyncadd [#allocation24], %s549
          %s551 = sshll.u32 [#allocation25], 4
          %s552 = int_to_ptr.vmem [resolvable:$true] %s551
          %557 = dma.hbm_to_vmem [thread:$0]  %s12, 2048, %s552, [#allocation24], 128, 128, 8
        $region56: #{tpu_custom_call.1} parent=11 // pred_fallthru
          _
        // Predicated region
        $region57: #{tpu_custom_call.1} parent=11 // pred_check
          %p558 = pneg %p358
        $region58: #{tpu_custom_call.1} parent=11 // pred_check_branch
          %560 = sbr.rel (%p558) target = $region60
        $region59: #{tpu_custom_call.1} parent=11 // pred_region
          %s562 = ssub.s32 16, 16
          %563 = vsyncadd [#allocation27], %s562
          %s565 = sshll.u32 [#allocation26], 4
          %s566 = int_to_ptr.vmem [resolvable:$true] %s565
          %568 = dma.hbm_to_vmem [thread:$0]  %s13, 16, %s566, [#allocation27]
        $region60: #{tpu_custom_call.1} parent=11 // pred_fallthru
          _
      $region12: #{tpu_custom_call.1} parent=5 // pred_fallthru
        _
      %p569 = scmp.lt.s32.totalorder %s40, 2
      // Predicated region
      $region61: #{tpu_custom_call.1} parent=5 // pred_check
        %p570 = pneg %p569
      $region62: #{tpu_custom_call.1} parent=5 // pred_check_branch
        %572 = sbr.rel (%p570) target = $region64
      $region63: #{tpu_custom_call.1} parent=5 // pred_region
        // Predicated region
        $region65: #{tpu_custom_call.1} parent=63 // pred_check
          %p573 = pneg %p72
        $region66: #{tpu_custom_call.1} parent=63 // pred_check_branch
          %575 = sbr.rel (%p573) target = $region68
        $region67: #{tpu_custom_call.1} parent=63 // pred_region
          %s576 = sand.u32 %s62, 1
          %s577 = scalar_lea.sflag [#allocation6], %s576
          %s578 = sand.u32 %s62, 1
          %s579 = smul.addr %s578, 8
          %s580 = scalar_lea.vmem [#allocation5], %s579
          %s582 = ssub.s32 128, 128
          %583 = vsyncadd %s577, %s582
          %s584 = smul.addr %s47, 128
          %s585 = scalar_lea.hbm %s0, %s584
          %s587 = sshll.u32 %s580, 4
          %s588 = int_to_ptr.vmem [resolvable:$true] %s587
          %590 = dma.hbm_to_vmem [thread:$0]  %s585, 128, %s588, %s577
        $region68: #{tpu_custom_call.1} parent=63 // pred_fallthru
          _
        // Predicated region
        $region69: #{tpu_custom_call.1} parent=63 // pred_check
          %p591 = pneg %p100
        $region70: #{tpu_custom_call.1} parent=63 // pred_check_branch
          %593 = sbr.rel (%p591) target = $region72
        $region71: #{tpu_custom_call.1} parent=63 // pred_region
          %s594 = sand.u32 %s40, 1
          %s595 = scalar_lea.sflag [#allocation9], %s594
          %s596 = sand.u32 %s90, 1
          %s597 = smul.addr %s596, 8
          %s598 = scalar_lea.vmem [#allocation8], %s597
          %s600 = ssub.s32 128, 128
          %601 = vsyncadd %s595, %s600
          %s602 = sadd.s32 %s48, %s47
          %s603 = smul.addr %s602, 128
          %s604 = scalar_lea.hbm %s1, %s603
          %s606 = sshll.u32 %s598, 4
          %s607 = int_to_ptr.vmem [resolvable:$true] %s606
          %609 = dma.hbm_to_vmem [thread:$0]  %s604, 128, %s607, %s595
        $region72: #{tpu_custom_call.1} parent=63 // pred_fallthru
          _
      $region64: #{tpu_custom_call.1} parent=5 // pred_fallthru
        _
      %p610 = scmp.le.s32.totalorder 1, %s40
      %p611 = scmp.lt.s32.totalorder %s40, 3
      %p612 = pnand %p610, %p611
      %p613 = pneg %p612
      // Predicated region
      $region73: #{tpu_custom_call.1} parent=5 // pred_check
        _
      $region74: #{tpu_custom_call.1} parent=5 // pred_check_branch
        %615 = sbr.rel (%p612) target = $region76
      $region75: #{tpu_custom_call.1} parent=5 // pred_region
        %s616 = ssub.s32 %s40, 1
        %s617 = sand.u32 %s65, 1
        %s618 = scalar_lea.sflag [#allocation6], %s617
        %s619 = sand.u32 %s65, 1
        %s620 = smul.addr %s619, 8
        %s621 = scalar_lea.vmem [#allocation5], %s620
        // Predicated region
        $region77: #{tpu_custom_call.1} parent=75 // pred_check
          %p622 = pneg %p78
        $region78: #{tpu_custom_call.1} parent=75 // pred_check_branch
          %624 = sbr.rel (%p622) target = $region80
        $region79: #{tpu_custom_call.1} parent=75 // pred_region
          %625 = dma.done %s618, 128
        $region80: #{tpu_custom_call.1} parent=75 // pred_fallthru
          _
        %s626 = sand.u32 %s45, 1
        %s627 = scalar_lea.sflag [#allocation9], %s626
        %s628 = sand.u32 %s93, 1
        %s629 = smul.addr %s628, 8
        %s630 = scalar_lea.vmem [#allocation8], %s629
        // Predicated region
        $region81: #{tpu_custom_call.1} parent=75 // pred_check
          %p631 = pneg %p106
        $region82: #{tpu_custom_call.1} parent=75 // pred_check_branch
          %633 = sbr.rel (%p631) target = $region84
        $region83: #{tpu_custom_call.1} parent=75 // pred_region
          %634 = dma.done %s627, 128
        $region84: #{tpu_custom_call.1} parent=75 // pred_fallthru
          _
        // Predicated region
        $region85: #{tpu_custom_call.1} parent=75 // pred_check
          %p635 = pneg %p127
        $region86: #{tpu_custom_call.1} parent=75 // pred_check_branch
          %637 = sbr.rel (%p635) target = $region88
        $region87: #{tpu_custom_call.1} parent=75 // pred_region
          %638 = dma.done [#allocation9], 16
        $region88: #{tpu_custom_call.1} parent=75 // pred_fallthru
          _
        // Predicated region
        $region89: #{tpu_custom_call.1} parent=75 // pred_check
          %p639 = pneg %p148
        $region90: #{tpu_custom_call.1} parent=75 // pred_check_branch
          %641 = sbr.rel (%p639) target = $region92
        $region91: #{tpu_custom_call.1} parent=75 // pred_region
          %642 = dma.done [#allocation12], 16
        $region92: #{tpu_custom_call.1} parent=75 // pred_fallthru
          _
        // Predicated region
        $region93: #{tpu_custom_call.1} parent=75 // pred_check
          %p643 = pneg %p169
        $region94: #{tpu_custom_call.1} parent=75 // pred_check_branch
          %645 = sbr.rel (%p643) target = $region96
        $region95: #{tpu_custom_call.1} parent=75 // pred_region
          %646 = dma.done [#allocation12], 512
        $region96: #{tpu_custom_call.1} parent=75 // pred_fallthru
          _
        // Predicated region
        $region97: #{tpu_custom_call.1} parent=75 // pred_check
          %p647 = pneg %p190
        $region98: #{tpu_custom_call.1} parent=75 // pred_check_branch
          %649 = sbr.rel (%p647) target = $region100
        $region99: #{tpu_custom_call.1} parent=75 // pred_region
          %650 = dma.done [#allocation15], 16
        $region100: #{tpu_custom_call.1} parent=75 // pred_fallthru
          _
        // Predicated region
        $region101: #{tpu_custom_call.1} parent=75 // pred_check
          %p651 = pneg %p211
        $region102: #{tpu_custom_call.1} parent=75 // pred_check_branch
          %653 = sbr.rel (%p651) target = $region104
        $region103: #{tpu_custom_call.1} parent=75 // pred_region
          %654 = dma.done [#allocation15], 512
        $region104: #{tpu_custom_call.1} parent=75 // pred_fallthru
          _
        // Predicated region
        $region105: #{tpu_custom_call.1} parent=75 // pred_check
          %p655 = pneg %p232
        $region106: #{tpu_custom_call.1} parent=75 // pred_check_branch
          %657 = sbr.rel (%p655) target = $region108
        $region107: #{tpu_custom_call.1} parent=75 // pred_region
          %658 = dma.done [#allocation18], 16
        $region108: #{tpu_custom_call.1} parent=75 // pred_fallthru
          _
        // Predicated region
        $region109: #{tpu_custom_call.1} parent=75 // pred_check
          %p659 = pneg %p253
        $region110: #{tpu_custom_call.1} parent=75 // pred_check_branch
          %661 = sbr.rel (%p659) target = $region112
        $region111: #{tpu_custom_call.1} parent=75 // pred_region
          %662 = dma.done [#allocation18], 16
        $region112: #{tpu_custom_call.1} parent=75 // pred_fallthru
          _
        // Predicated region
        $region113: #{tpu_custom_call.1} parent=75 // pred_check
          %p663 = pneg %p274
        $region114: #{tpu_custom_call.1} parent=75 // pred_check_branch
          %665 = sbr.rel (%p663) target = $region116
        $region115: #{tpu_custom_call.1} parent=75 // pred_region
          %666 = dma.done [#allocation21], 16
        $region116: #{tpu_custom_call.1} parent=75 // pred_fallthru
          _
        // Predicated region
        $region117: #{tpu_custom_call.1} parent=75 // pred_check
          %p667 = pneg %p295
        $region118: #{tpu_custom_call.1} parent=75 // pred_check_branch
          %669 = sbr.rel (%p667) target = $region120
        $region119: #{tpu_custom_call.1} parent=75 // pred_region
          %670 = dma.done [#allocation21], 512
        $region120: #{tpu_custom_call.1} parent=75 // pred_fallthru
          _
        // Predicated region
        $region121: #{tpu_custom_call.1} parent=75 // pred_check
          %p671 = pneg %p316
        $region122: #{tpu_custom_call.1} parent=75 // pred_check_branch
          %673 = sbr.rel (%p671) target = $region124
        $region123: #{tpu_custom_call.1} parent=75 // pred_region
          %674 = dma.done [#allocation24], 16
        $region124: #{tpu_custom_call.1} parent=75 // pred_fallthru
          _
        // Predicated region
        $region125: #{tpu_custom_call.1} parent=75 // pred_check
          %p675 = pneg %p337
        $region126: #{tpu_custom_call.1} parent=75 // pred_check_branch
          %677 = sbr.rel (%p675) target = $region128
        $region127: #{tpu_custom_call.1} parent=75 // pred_region
          %678 = dma.done [#allocation24], 2048
        $region128: #{tpu_custom_call.1} parent=75 // pred_fallthru
          _
        // Predicated region
        $region129: #{tpu_custom_call.1} parent=75 // pred_check
          %p679 = pneg %p358
        $region130: #{tpu_custom_call.1} parent=75 // pred_check_branch
          %681 = sbr.rel (%p679) target = $region132
        $region131: #{tpu_custom_call.1} parent=75 // pred_region
          %682 = dma.done [#allocation27], 16
        $region132: #{tpu_custom_call.1} parent=75 // pred_fallthru
          _
        %s683 = sand.u32 %s65, 1
        %s684 = scalar_lea.sflag [#allocation6], %s683
        %s685 = sand.u32 %s65, 1
        %s686 = smul.addr %s685, 8
        %s687 = scalar_lea.vmem [#allocation5], %s686
        %p688 = pneg %p78
        %p689 = pneg %p75
        %s690 = sand.u32 %s45, 1
        %s691 = scalar_lea.sflag [#allocation9], %s690
        %s692 = sand.u32 %s93, 1
        %s693 = smul.addr %s692, 8
        %s694 = scalar_lea.vmem [#allocation8], %s693
        %p695 = pneg %p106
        %p696 = pneg %p103
        %p697 = pneg %p127
        %p698 = pneg %p124
        %p699 = pneg %p148
        %p700 = pneg %p145
        %p701 = pneg %p169
        %p702 = pneg %p166
        %p703 = pneg %p190
        %p704 = pneg %p187
        %p705 = pneg %p211
        %p706 = pneg %p208
        %p707 = pneg %p232
        %p708 = pneg %p229
        %p709 = pneg %p253
        %p710 = pneg %p250
        %p711 = pneg %p274
        %p712 = pneg %p271
        %p713 = pneg %p295
        %p714 = pneg %p292
        %p715 = pneg %p316
        %p716 = pneg %p313
        %p717 = pneg %p337
        %p718 = pneg %p334
        %p719 = pneg %p358
        %p720 = pneg %p355
        %p721 = pneg %p386
        %p722 = pneg %p383
        %s723 = sand.u32 %s373, 1
        %s724 = scalar_lea.sflag [#allocation7], %s723
        %s725 = sand.u32 %s373, 1
        %s726 = smul.addr %s725, 8
        %s727 = scalar_lea.vmem [#allocation28], %s726
        %p728 = pneg %p414
        %p729 = pneg %p411
        %s730 = sand.u32 %s401, 1
        %s731 = scalar_lea.sflag [#allocation30], %s730
        %s732 = sand.u32 %s401, 1
        %s733 = smul.addr %s732, 32
        %s734 = scalar_lea.vmem [#allocation29], %s733
        %p735 = scmp.eq.s32.totalorder %s50, 0
        // Predicated region
        $region133: #{tpu_custom_call.1} parent=75 // pred_check
          %p736 = pneg %p735
        $region134: #{tpu_custom_call.1} parent=75 // pred_check_branch
          %738 = sbr.rel (%p736) target = $region136
        $region135: #{tpu_custom_call.1} parent=75 // pred_region
          %v739 = vld [vmem:[%s621] sm:$0xff]
          %v740 = vld [vmem:[#allocation10] sm:$0x1]
          %v741 = vld [vmem:[#allocation11] sm:$0x1]
          %vm742 = vcmask 261120
          %v743 = vsel %vm742, %v739, 0.0
          %744 = vadd.xlane.f32.xlu0 %v743
          %v745 = vpop.xlane.xlu0 %744
          %v746 = vrcp.pop 32.0
          %v747 = vmul.f32 %v745, %v746
          %v748 = vsub.f32 %v739, %v747
          %v749 = vmul.f32 %v748, %v748
          %v750 = vsel %vm742, %v749, 0.0
          %751 = vadd.xlane.f32.xlu0 %v750
          %v752 = vpop.xlane.xlu0 %751
          %v753 = vmul.f32 %v752, %v746
          %v754 = vadd.f32 %v753, 1e-05
          %v755 = vrsqrt.pop %v754
          %v756 = vmul.f32 %v748, %v755
          %v758 = vlaneseq
          %v759 = vshrl.u32 %v758, 7
          %v760 = vsub.s32 0, %v759
          %v761 = vrot.slane %v740, %v760
          %v763 = vmul.f32 %v756, %v761
          %v765 = vlaneseq
          %v766 = vshrl.u32 %v765, 7
          %v767 = vsub.s32 0, %v766
          %v768 = vrot.slane %v741, %v767
          %v770 = vadd.f32 %v763, %v768
          %v771 = vld [vmem:[#allocation13] sm:$0xff]
          %v772 = vld [vmem:[#allocation13 + $0x8] sm:$0xff]
          %v773 = vld [vmem:[#allocation13 + $0x10] sm:$0xff]
          %v774 = vld [vmem:[#allocation13 + $0x18] sm:$0xff]
          %v775 = vld [vmem:[#allocation14] sm:$0x1]
          %v777 = vlaneseq
          %v778 = vshrl.u32 %v777, 7
          %v779 = vsub.s32 0, %v778
          %v780 = vrot.slane %v775, %v779
          %v783 = vsel %vm742, %v770, 0
          %785 = vmatprep.subr.mxu0 0.0
          %786 = vmatpush1.msra.mxu0 %v771
          %787 = vmatprep.subr.mxu0 0.0
          %788 = vmatpush1.msra.mxu0 %v772
          %789 = vmatprep.subr.mxu0 0.0
          %790 = vmatpush1.msra.mxu0 %v773
          %791 = vmatprep.subr.mxu0 0.0
          %792 = vmatpush1.msra.mxu0 %v774
          %793 = vmatprep.subr.mxu0 0.0
          %794 = vmatpush1.msra.mxu0 0.0
          %795 = vmatprep.subr.mxu0 0.0
          %796 = vmatpush1.msra.mxu0 0.0
          %797 = vmatprep.subr.mxu0 0.0
          %798 = vmatpush1.msra.mxu0 0.0
          %799 = vmatprep.subr.mxu0 0.0
          %800 = vmatpush1.msra.mxu0 0.0
          %801 = vmatprep.subr.mxu0 0.0
          %802 = vmatpush1.msra.mxu0 0.0
          %803 = vmatprep.subr.mxu0 0.0
          %804 = vmatpush1.msra.mxu0 0.0
          %805 = vmatprep.subr.mxu0 0.0
          %806 = vmatpush1.msra.mxu0 0.0
          %807 = vmatprep.subr.mxu0 0.0
          %808 = vmatpush1.msra.mxu0 0.0
          %809 = vmatprep.subr.mxu0 0.0
          %810 = vmatpush1.msra.mxu0 0.0
          %811 = vmatprep.subr.mxu0 0.0
          %812 = vmatpush1.msra.mxu0 0.0
          %813 = vmatprep.subr.mxu0 0.0
          %814 = vmatpush1.msra.mxu0 0.0
          %815 = vmatprep.subr.mxu0 0.0
          %816 = vmatpush1.msra.mxu0 0.0
          %817 = vmatprep.subr.mxu0 0.0
          %818 = vmatpush1.msra.mxu0 0.0
          %819 = vmatprep.subr.mxu0 0.0
          %820 = vmatpush1.msra.mxu0 0.0
          %821 = vmatprep.subr.mxu0 0.0
          %822 = vmatpush1.msra.mxu0 0.0
          %823 = vmatprep.subr.mxu0 0.0
          %824 = vmatpush1.msra.mxu0 0.0
          %825 = vmatprep.subr.mxu0 0.0
          %826 = vmatpush1.msra.mxu0 0.0
          %827 = vmatprep.subr.mxu0 0.0
          %828 = vmatpush1.msra.mxu0 0.0
          %829 = vmatprep.subr.mxu0 0.0
          %830 = vmatpush1.msra.mxu0 0.0
          %831 = vmatprep.subr.mxu0 0.0
          %832 = vmatpush1.msra.mxu0 0.0
          %833 = vmatprep.subr.mxu0 0.0
          %834 = vmatpush1.msra.mxu0 0.0
          %835 = vmatprep.subr.mxu0 0.0
          %836 = vmatpush1.msra.mxu0 0.0
          %837 = vmatprep.subr.mxu0 0.0
          %838 = vmatpush1.msra.mxu0 0.0
          %839 = vmatprep.subr.mxu0 0.0
          %840 = vmatpush1.msra.mxu0 0.0
          %841 = vmatprep.subr.mxu0 0.0
          %842 = vmatpush1.msra.mxu0 0.0
          %843 = vmatprep.subr.mxu0 0.0
          %844 = vmatpush1.msra.mxu0 0.0
          %845 = vmatprep.subr.mxu0 0.0
          %846 = vmatpush1.msra.mxu0 0.0
          %847 = vmatprep.subr.mxu0 0.0
          %848 = vmatpush1.msra.mxu0 0.0
          %849 = vmatprep.mubr.f32.mxu0 0.0
          %850 = vmatmul.mubr.f32.gmra.mrb[0].mxu0 %v783
          %v851 = vpop.f32.mrb[0].mxu0
          %v852 = vadd.f32 %v780, %v851
          %v853 = vpop.f32.mrb[0].mxu0
          %854 = vdwg.mxu0
          %855 = vst.msk [vmem:[#allocation2] sm:$0xff] %vm742, %v852
          %857 = vrot.lane.b32.xlu0 %v852, 96
          %v858 = vpop.permute.xlu0 %857
          %860 = vst.msk [vmem:[#allocation3] sm:$0xff] %vm742, %v858
          %861 = vrot.lane.b32.xlu0 %v852, 64
          %v862 = vpop.permute.xlu0 %861
          %864 = vst.msk [vmem:[#allocation4] sm:$0xff] %vm742, %v862
        $region136: #{tpu_custom_call.1} parent=75 // pred_fallthru
          _
        %s865 = smul.u32 %s50, 8
        %v866 = vld [vmem:[%s630] sm:$0xff]
        %s867 = scalar_lea.vmem [#allocation2], %s865
        %v868 = vld [vmem:[%s867] sm:$0xff]
        %v869 = vld [vmem:[#allocation3] sm:$0xff]
        %v870 = vld [vmem:[#allocation4] sm:$0xff]
        %v871 = vlaneseq
        %v872 = vshrl.u32 %v871, 7
        %v873 = vstv %s865
        %v874 = vadd.s32 %v873, %v872
        %v875 = vlaneseq
        %v876 = vand.u32 %v875, 127
        %vm877 = vcmp.ge.s32.totalorder %v874, %v876
        %vm878 = vcmask 64512
        %v880 = vsel %vm878, %v868, 0
        %v883 = vsel %vm878, %v869, 0
        %885 = vmatprep.subr.mxu0 0.0
        %886 = vmatpush1.xpose.msra.mxu0 %v883
        %887 = vmatprep.subr.mxu0 0.0
        %888 = vmatpush1.xpose.msra.mxu0 0.0
        %889 = vmatprep.subr.mxu0 0.0
        %890 = vmatpush1.xpose.msra.mxu0 0.0
        %891 = vmatprep.subr.mxu0 0.0
        %892 = vmatpush1.xpose.msra.mxu0 0.0
        %893 = vmatprep.subr.mxu0 0.0
        %894 = vmatpush1.xpose.msra.mxu0 0.0
        %895 = vmatprep.subr.mxu0 0.0
        %896 = vmatpush1.xpose.msra.mxu0 0.0
        %897 = vmatprep.subr.mxu0 0.0
        %898 = vmatpush1.xpose.msra.mxu0 0.0
        %899 = vmatprep.subr.mxu0 0.0
        %900 = vmatpush1.xpose.msra.mxu0 0.0
        %901 = vmatprep.subr.mxu0 0.0
        %902 = vmatpush1.xpose.msra.mxu0 0.0
        %903 = vmatprep.subr.mxu0 0.0
        %904 = vmatpush1.xpose.msra.mxu0 0.0
        %905 = vmatprep.subr.mxu0 0.0
        %906 = vmatpush1.xpose.msra.mxu0 0.0
        %907 = vmatprep.subr.mxu0 0.0
        %908 = vmatpush1.xpose.msra.mxu0 0.0
        %909 = vmatprep.subr.mxu0 0.0
        %910 = vmatpush1.xpose.msra.mxu0 0.0
        %911 = vmatprep.subr.mxu0 0.0
        %912 = vmatpush1.xpose.msra.mxu0 0.0
        %913 = vmatprep.subr.mxu0 0.0
        %914 = vmatpush1.xpose.msra.mxu0 0.0
        %915 = vmatprep.subr.mxu0 0.0
        %916 = vmatpush1.xpose.msra.mxu0 0.0
        %917 = vmatprep.subr.mxu0 0.0
        %918 = vmatpush1.xpose.msra.mxu0 0.0
        %919 = vmatprep.subr.mxu0 0.0
        %920 = vmatpush1.xpose.msra.mxu0 0.0
        %921 = vmatprep.subr.mxu0 0.0
        %922 = vmatpush1.xpose.msra.mxu0 0.0
        %923 = vmatprep.subr.mxu0 0.0
        %924 = vmatpush1.xpose.msra.mxu0 0.0
        %925 = vmatprep.subr.mxu0 0.0
        %926 = vmatpush1.xpose.msra.mxu0 0.0
        %927 = vmatprep.subr.mxu0 0.0
        %928 = vmatpush1.xpose.msra.mxu0 0.0
        %929 = vmatprep.subr.mxu0 0.0
        %930 = vmatpush1.xpose.msra.mxu0 0.0
        %931 = vmatprep.subr.mxu0 0.0
        %932 = vmatpush1.xpose.msra.mxu0 0.0
        %933 = vmatprep.subr.mxu0 0.0
        %934 = vmatpush1.xpose.msra.mxu0 0.0
        %935 = vmatprep.subr.mxu0 0.0
        %936 = vmatpush1.xpose.msra.mxu0 0.0
        %937 = vmatprep.subr.mxu0 0.0
        %938 = vmatpush1.xpose.msra.mxu0 0.0
        %939 = vmatprep.subr.mxu0 0.0
        %940 = vmatpush1.xpose.msra.mxu0 0.0
        %941 = vmatprep.subr.mxu0 0.0
        %942 = vmatpush1.xpose.msra.mxu0 0.0
        %943 = vmatprep.subr.mxu0 0.0
        %944 = vmatpush1.xpose.msra.mxu0 0.0
        %945 = vmatprep.subr.mxu0 0.0
        %946 = vmatpush1.xpose.msra.mxu0 0.0
        %947 = vmatprep.subr.mxu0 0.0
        %948 = vmatpush1.xpose.msra.mxu0 0.0
        %949 = vmatprep.mubr.f32.mxu0 0.0
        %950 = vmatmul.mubr.f32.gmra.mrb[0].mxu0 %v880
        %v951 = vpop.f32.mrb[0].mxu0
        %v952 = vadd.f32 0.0, %v951
        %v953 = vpop.f32.mrb[0].mxu0
        %954 = vdwg.mxu0
        %v955 = vsel %vm877, %v952, -inf
        %v956 = vsel %vm878, %v955, -inf
        %957 = vmax.xlane.f32.xlu0 %v956
        %v958 = vpop.xlane.xlu0 %957
        %v959 = vsub.f32 %v955, %v958
        %v960 = vmul.f32 %v959, 1.442695
        %v961 = vpow.pop %v960
        %v962 = vsel %vm878, %v961, 0.0
        %963 = vadd.xlane.f32.xlu0 %v962
        %v964 = vpop.xlane.xlu0 %963
        %v965 = vrcp.pop %v964
        %v966 = vmul.f32 %v961, %v965
        %967 = vst.msk [vmem:[%s734] sm:$0xff] %vm878, %v966
        %v969 = vsel %vm878, %v966, 0
        %971 = vmatprep.subr.mxu0 0.0
        %972 = vmatpush1.msra.mxu0 %v870
        %973 = vmatprep.subr.mxu0 0.0
        %974 = vmatpush1.msra.mxu0 0.0
        %975 = vmatprep.subr.mxu0 0.0
        %976 = vmatpush1.msra.mxu0 0.0
        %977 = vmatprep.subr.mxu0 0.0
        %978 = vmatpush1.msra.mxu0 0.0
        %979 = vmatprep.subr.mxu0 0.0
        %980 = vmatpush1.msra.mxu0 0.0
        %981 = vmatprep.subr.mxu0 0.0
        %982 = vmatpush1.msra.mxu0 0.0
        %983 = vmatprep.subr.mxu0 0.0
        %984 = vmatpush1.msra.mxu0 0.0
        %985 = vmatprep.subr.mxu0 0.0
        %986 = vmatpush1.msra.mxu0 0.0
        %987 = vmatprep.subr.mxu0 0.0
        %988 = vmatpush1.msra.mxu0 0.0
        %989 = vmatprep.subr.mxu0 0.0
        %990 = vmatpush1.msra.mxu0 0.0
        %991 = vmatprep.subr.mxu0 0.0
        %992 = vmatpush1.msra.mxu0 0.0
        %993 = vmatprep.subr.mxu0 0.0
        %994 = vmatpush1.msra.mxu0 0.0
        %995 = vmatprep.subr.mxu0 0.0
        %996 = vmatpush1.msra.mxu0 0.0
        %997 = vmatprep.subr.mxu0 0.0
        %998 = vmatpush1.msra.mxu0 0.0
        %999 = vmatprep.subr.mxu0 0.0
        %1000 = vmatpush1.msra.mxu0 0.0
        %1001 = vmatprep.subr.mxu0 0.0
        %1002 = vmatpush1.msra.mxu0 0.0
        %1003 = vmatprep.subr.mxu0 0.0
        %1004 = vmatpush1.msra.mxu0 0.0
        %1005 = vmatprep.subr.mxu0 0.0
        %1006 = vmatpush1.msra.mxu0 0.0
        %1007 = vmatprep.subr.mxu0 0.0
        %1008 = vmatpush1.msra.mxu0 0.0
        %1009 = vmatprep.subr.mxu0 0.0
        %1010 = vmatpush1.msra.mxu0 0.0
        %1011 = vmatprep.subr.mxu0 0.0
        %1012 = vmatpush1.msra.mxu0 0.0
        %1013 = vmatprep.subr.mxu0 0.0
        %1014 = vmatpush1.msra.mxu0 0.0
        %1015 = vmatprep.subr.mxu0 0.0
        %1016 = vmatpush1.msra.mxu0 0.0
        %1017 = vmatprep.subr.mxu0 0.0
        %1018 = vmatpush1.msra.mxu0 0.0
        %1019 = vmatprep.subr.mxu0 0.0
        %1020 = vmatpush1.msra.mxu0 0.0
        %1021 = vmatprep.subr.mxu0 0.0
        %1022 = vmatpush1.msra.mxu0 0.0
        %1023 = vmatprep.subr.mxu0 0.0
        %1024 = vmatpush1.msra.mxu0 0.0
        %1025 = vmatprep.subr.mxu0 0.0
        %1026 = vmatpush1.msra.mxu0 0.0
        %1027 = vmatprep.subr.mxu0 0.0
        %1028 = vmatpush1.msra.mxu0 0.0
        %1029 = vmatprep.subr.mxu0 0.0
        %1030 = vmatpush1.msra.mxu0 0.0
        %1031 = vmatprep.subr.mxu0 0.0
        %1032 = vmatpush1.msra.mxu0 0.0
        %1033 = vmatprep.subr.mxu0 0.0
        %1034 = vmatpush1.msra.mxu0 0.0
        %1035 = vmatprep.mubr.f32.mxu0 0.0
        %1036 = vmatmul.mubr.f32.gmra.mrb[0].mxu0 %v969
        %v1037 = vpop.f32.mrb[0].mxu0
        %v1038 = vadd.f32 0.0, %v1037
        %v1039 = vpop.f32.mrb[0].mxu0
        %1040 = vdwg.mxu0
        %v1041 = vld [vmem:[#allocation16] sm:$0xff]
        %1042 = vrot.lane.b32.xlu0 %v868, 120
        %v1043 = vpop.permute.xlu0 %1042
        %1044 = vrot.lane.b32.xlu0 %v869, 120
        %v1045 = vpop.permute.xlu0 %1044
        %v1046 = vsel %vm878, %v1043, 0
        %v1048 = vsel %vm878, %v1045, 0
        %1050 = vmatprep.subr.mxu0 0.0
        %1051 = vmatpush1.xpose.msra.mxu0 %v1048
        %1052 = vmatprep.subr.mxu0 0.0
        %1053 = vmatpush1.xpose.msra.mxu0 0.0
        %1054 = vmatprep.subr.mxu0 0.0
        %1055 = vmatpush1.xpose.msra.mxu0 0.0
        %1056 = vmatprep.subr.mxu0 0.0
        %1057 = vmatpush1.xpose.msra.mxu0 0.0
        %1058 = vmatprep.subr.mxu0 0.0
        %1059 = vmatpush1.xpose.msra.mxu0 0.0
        %1060 = vmatprep.subr.mxu0 0.0
        %1061 = vmatpush1.xpose.msra.mxu0 0.0
        %1062 = vmatprep.subr.mxu0 0.0
        %1063 = vmatpush1.xpose.msra.mxu0 0.0
        %1064 = vmatprep.subr.mxu0 0.0
        %1065 = vmatpush1.xpose.msra.mxu0 0.0
        %1066 = vmatprep.subr.mxu0 0.0
        %1067 = vmatpush1.xpose.msra.mxu0 0.0
        %1068 = vmatprep.subr.mxu0 0.0
        %1069 = vmatpush1.xpose.msra.mxu0 0.0
        %1070 = vmatprep.subr.mxu0 0.0
        %1071 = vmatpush1.xpose.msra.mxu0 0.0
        %1072 = vmatprep.subr.mxu0 0.0
        %1073 = vmatpush1.xpose.msra.mxu0 0.0
        %1074 = vmatprep.subr.mxu0 0.0
        %1075 = vmatpush1.xpose.msra.mxu0 0.0
        %1076 = vmatprep.subr.mxu0 0.0
        %1077 = vmatpush1.xpose.msra.mxu0 0.0
        %1078 = vmatprep.subr.mxu0 0.0
        %1079 = vmatpush1.xpose.msra.mxu0 0.0
        %1080 = vmatprep.subr.mxu0 0.0
        %1081 = vmatpush1.xpose.msra.mxu0 0.0
        %1082 = vmatprep.subr.mxu0 0.0
        %1083 = vmatpush1.xpose.msra.mxu0 0.0
        %1084 = vmatprep.subr.mxu0 0.0
        %1085 = vmatpush1.xpose.msra.mxu0 0.0
        %1086 = vmatprep.subr.mxu0 0.0
        %1087 = vmatpush1.xpose.msra.mxu0 0.0
        %1088 = vmatprep.subr.mxu0 0.0
        %1089 = vmatpush1.xpose.msra.mxu0 0.0
        %1090 = vmatprep.subr.mxu0 0.0
        %1091 = vmatpush1.xpose.msra.mxu0 0.0
        %1092 = vmatprep.subr.mxu0 0.0
        %1093 = vmatpush1.xpose.msra.mxu0 0.0
        %1094 = vmatprep.subr.mxu0 0.0
        %1095 = vmatpush1.xpose.msra.mxu0 0.0
        %1096 = vmatprep.subr.mxu0 0.0
        %1097 = vmatpush1.xpose.msra.mxu0 0.0
        %1098 = vmatprep.subr.mxu0 0.0
        %1099 = vmatpush1.xpose.msra.mxu0 0.0
        %1100 = vmatprep.subr.mxu0 0.0
        %1101 = vmatpush1.xpose.msra.mxu0 0.0
        %1102 = vmatprep.subr.mxu0 0.0
        %1103 = vmatpush1.xpose.msra.mxu0 0.0
        %1104 = vmatprep.subr.mxu0 0.0
        %1105 = vmatpush1.xpose.msra.mxu0 0.0
        %1106 = vmatprep.subr.mxu0 0.0
        %1107 = vmatpush1.xpose.msra.mxu0 0.0
        %1108 = vmatprep.subr.mxu0 0.0
        %1109 = vmatpush1.xpose.msra.mxu0 0.0
        %1110 = vmatprep.subr.mxu0 0.0
        %1111 = vmatpush1.xpose.msra.mxu0 0.0
        %1112 = vmatprep.subr.mxu0 0.0
        %1113 = vmatpush1.xpose.msra.mxu0 0.0
        %1114 = vmatprep.mubr.f32.mxu0 0.0
        %1115 = vmatmul.mubr.f32.gmra.mrb[0].mxu0 %v1046
        %v1116 = vpop.f32.mrb[0].mxu0
        %v1117 = vadd.f32 0.0, %v1116
        %v1118 = vpop.f32.mrb[0].mxu0
        %1119 = vdwg.mxu0
        %v1120 = vsel %vm877, %v1117, -inf
        %v1121 = vsel %vm878, %v1120, -inf
        %1122 = vmax.xlane.f32.xlu0 %v1121
        %v1123 = vpop.xlane.xlu0 %1122
        %v1124 = vsub.f32 %v1120, %v1123
        %v1125 = vmul.f32 %v1124, 1.442695
        %v1126 = vpow.pop %v1125
        %v1127 = vsel %vm878, %v1126, 0.0
        %1128 = vadd.xlane.f32.xlu0 %v1127
        %v1129 = vpop.xlane.xlu0 %1128
        %v1130 = vrcp.pop %v1129
        %v1131 = vmul.f32 %v1126, %v1130
        %s1132 = scalar_lea.vmem %s734, 8 [#allocation29]
        %1133 = vst.msk [vmem:[%s1132] sm:$0xff] %vm878, %v1131
        %1135 = vrot.lane.b32.xlu0 %v870, 120
        %v1136 = vpop.permute.xlu0 %1135
        %v1139 = vsel %vm878, %v1131, 0
        %1141 = vmatprep.subr.mxu0 0.0
        %1142 = vmatpush1.msra.mxu0 %v1136
        %1143 = vmatprep.subr.mxu0 0.0
        %1144 = vmatpush1.msra.mxu0 0.0
        %1145 = vmatprep.subr.mxu0 0.0
        %1146 = vmatpush1.msra.mxu0 0.0
        %1147 = vmatprep.subr.mxu0 0.0
        %1148 = vmatpush1.msra.mxu0 0.0
        %1149 = vmatprep.subr.mxu0 0.0
        %1150 = vmatpush1.msra.mxu0 0.0
        %1151 = vmatprep.subr.mxu0 0.0
        %1152 = vmatpush1.msra.mxu0 0.0
        %1153 = vmatprep.subr.mxu0 0.0
        %1154 = vmatpush1.msra.mxu0 0.0
        %1155 = vmatprep.subr.mxu0 0.0
        %1156 = vmatpush1.msra.mxu0 0.0
        %1157 = vmatprep.subr.mxu0 0.0
        %1158 = vmatpush1.msra.mxu0 0.0
        %1159 = vmatprep.subr.mxu0 0.0
        %1160 = vmatpush1.msra.mxu0 0.0
        %1161 = vmatprep.subr.mxu0 0.0
        %1162 = vmatpush1.msra.mxu0 0.0
        %1163 = vmatprep.subr.mxu0 0.0
        %1164 = vmatpush1.msra.mxu0 0.0
        %1165 = vmatprep.subr.mxu0 0.0
        %1166 = vmatpush1.msra.mxu0 0.0
        %1167 = vmatprep.subr.mxu0 0.0
        %1168 = vmatpush1.msra.mxu0 0.0
        %1169 = vmatprep.subr.mxu0 0.0
        %1170 = vmatpush1.msra.mxu0 0.0
        %1171 = vmatprep.subr.mxu0 0.0
        %1172 = vmatpush1.msra.mxu0 0.0
        %1173 = vmatprep.subr.mxu0 0.0
        %1174 = vmatpush1.msra.mxu0 0.0
        %1175 = vmatprep.subr.mxu0 0.0
        %1176 = vmatpush1.msra.mxu0 0.0
        %1177 = vmatprep.subr.mxu0 0.0
        %1178 = vmatpush1.msra.mxu0 0.0
        %1179 = vmatprep.subr.mxu0 0.0
        %1180 = vmatpush1.msra.mxu0 0.0
        %1181 = vmatprep.subr.mxu0 0.0
        %1182 = vmatpush1.msra.mxu0 0.0
        %1183 = vmatprep.subr.mxu0 0.0
        %1184 = vmatpush1.msra.mxu0 0.0
        %1185 = vmatprep.subr.mxu0 0.0
        %1186 = vmatpush1.msra.mxu0 0.0
        %1187 = vmatprep.subr.mxu0 0.0
        %1188 = vmatpush1.msra.mxu0 0.0
        %1189 = vmatprep.subr.mxu0 0.0
        %1190 = vmatpush1.msra.mxu0 0.0
        %1191 = vmatprep.subr.mxu0 0.0
        %1192 = vmatpush1.msra.mxu0 0.0
        %1193 = vmatprep.subr.mxu0 0.0
        %1194 = vmatpush1.msra.mxu0 0.0
        %1195 = vmatprep.subr.mxu0 0.0
        %1196 = vmatpush1.msra.mxu0 0.0
        %1197 = vmatprep.subr.mxu0 0.0
        %1198 = vmatpush1.msra.mxu0 0.0
        %1199 = vmatprep.subr.mxu0 0.0
        %1200 = vmatpush1.msra.mxu0 0.0
        %1201 = vmatprep.subr.mxu0 0.0
        %1202 = vmatpush1.msra.mxu0 0.0
        %1203 = vmatprep.subr.mxu0 0.0
        %1204 = vmatpush1.msra.mxu0 0.0
        %1205 = vmatprep.mubr.f32.mxu0 0.0
        %1206 = vmatmul.mubr.f32.gmra.mrb[0].mxu0 %v1139
        %v1207 = vpop.f32.mrb[0].mxu0
        %v1208 = vadd.f32 0.0, %v1207
        %v1209 = vpop.f32.mrb[0].mxu0
        %1210 = vdwg.mxu0
        %v1211 = vld [vmem:[#allocation16 + $0x8] sm:$0xff]
        %v1213 = vsel %vm878, %v1208, 0
        %1215 = vmatprep.subr.mxu0 0.0
        %1216 = vmatpush1.msra.mxu0 %v1211
        %1217 = vmatprep.subr.mxu0 0.0
        %1218 = vmatpush1.msra.mxu0 0.0
        %1219 = vmatprep.subr.mxu0 0.0
        %1220 = vmatpush1.msra.mxu0 0.0
        %1221 = vmatprep.subr.mxu0 0.0
        %1222 = vmatpush1.msra.mxu0 0.0
        %1223 = vmatprep.subr.mxu0 0.0
        %1224 = vmatpush1.msra.mxu0 0.0
        %1225 = vmatprep.subr.mxu0 0.0
        %1226 = vmatpush1.msra.mxu0 0.0
        %1227 = vmatprep.subr.mxu0 0.0
        %1228 = vmatpush1.msra.mxu0 0.0
        %1229 = vmatprep.subr.mxu0 0.0
        %1230 = vmatpush1.msra.mxu0 0.0
        %1231 = vmatprep.subr.mxu0 0.0
        %1232 = vmatpush1.msra.mxu0 0.0
        %1233 = vmatprep.subr.mxu0 0.0
        %1234 = vmatpush1.msra.mxu0 0.0
        %1235 = vmatprep.subr.mxu0 0.0
        %1236 = vmatpush1.msra.mxu0 0.0
        %1237 = vmatprep.subr.mxu0 0.0
        %1238 = vmatpush1.msra.mxu0 0.0
        %1239 = vmatprep.subr.mxu0 0.0
        %1240 = vmatpush1.msra.mxu0 0.0
        %1241 = vmatprep.subr.mxu0 0.0
        %1242 = vmatpush1.msra.mxu0 0.0
        %1243 = vmatprep.subr.mxu0 0.0
        %1244 = vmatpush1.msra.mxu0 0.0
        %1245 = vmatprep.subr.mxu0 0.0
        %1246 = vmatpush1.msra.mxu0 0.0
        %1247 = vmatprep.subr.mxu0 0.0
        %1248 = vmatpush1.msra.mxu0 0.0
        %1249 = vmatprep.subr.mxu0 0.0
        %1250 = vmatpush1.msra.mxu0 0.0
        %1251 = vmatprep.subr.mxu0 0.0
        %1252 = vmatpush1.msra.mxu0 0.0
        %1253 = vmatprep.subr.mxu0 0.0
        %1254 = vmatpush1.msra.mxu0 0.0
        %1255 = vmatprep.subr.mxu0 0.0
        %1256 = vmatpush1.msra.mxu0 0.0
        %1257 = vmatprep.subr.mxu0 0.0
        %1258 = vmatpush1.msra.mxu0 0.0
        %1259 = vmatprep.subr.mxu0 0.0
        %1260 = vmatpush1.msra.mxu0 0.0
        %1261 = vmatprep.subr.mxu0 0.0
        %1262 = vmatpush1.msra.mxu0 0.0
        %1263 = vmatprep.subr.mxu0 0.0
        %1264 = vmatpush1.msra.mxu0 0.0
        %1265 = vmatprep.subr.mxu0 0.0
        %1266 = vmatpush1.msra.mxu0 0.0
        %1267 = vmatprep.subr.mxu0 0.0
        %1268 = vmatpush1.msra.mxu0 0.0
        %1269 = vmatprep.subr.mxu0 0.0
        %1270 = vmatpush1.msra.mxu0 0.0
        %1271 = vmatprep.subr.mxu0 0.0
        %1272 = vmatpush1.msra.mxu0 0.0
        %1273 = vmatprep.subr.mxu0 0.0
        %1274 = vmatpush1.msra.mxu0 0.0
        %1275 = vmatprep.subr.mxu0 0.0
        %1276 = vmatpush1.msra.mxu0 0.0
        %1277 = vmatprep.subr.mxu0 0.0
        %1278 = vmatpush1.msra.mxu0 0.0
        %1279 = vmatprep.mubr.f32.mxu0 0.0
        %1280 = vmatmul.mubr.f32.gmra.mrb[0].mxu0 %v1213
        %v1281 = vpop.f32.mrb[0].mxu0
        %v1282 = vadd.f32 0.0, %v1281
        %v1283 = vpop.f32.mrb[0].mxu0
        %1284 = vdwg.mxu0
        %v1286 = vsel %vm878, %v1038, 0
        %1288 = vmatprep.subr.mxu0 0.0
        %1289 = vmatpush1.msra.mxu0 %v1041
        %1290 = vmatprep.subr.mxu0 0.0
        %1291 = vmatpush1.msra.mxu0 0.0
        %1292 = vmatprep.subr.mxu0 0.0
        %1293 = vmatpush1.msra.mxu0 0.0
        %1294 = vmatprep.subr.mxu0 0.0
        %1295 = vmatpush1.msra.mxu0 0.0
        %1296 = vmatprep.subr.mxu0 0.0
        %1297 = vmatpush1.msra.mxu0 0.0
        %1298 = vmatprep.subr.mxu0 0.0
        %1299 = vmatpush1.msra.mxu0 0.0
        %1300 = vmatprep.subr.mxu0 0.0
        %1301 = vmatpush1.msra.mxu0 0.0
        %1302 = vmatprep.subr.mxu0 0.0
        %1303 = vmatpush1.msra.mxu0 0.0
        %1304 = vmatprep.subr.mxu0 0.0
        %1305 = vmatpush1.msra.mxu0 0.0
        %1306 = vmatprep.subr.mxu0 0.0
        %1307 = vmatpush1.msra.mxu0 0.0
        %1308 = vmatprep.subr.mxu0 0.0
        %1309 = vmatpush1.msra.mxu0 0.0
        %1310 = vmatprep.subr.mxu0 0.0
        %1311 = vmatpush1.msra.mxu0 0.0
        %1312 = vmatprep.subr.mxu0 0.0
        %1313 = vmatpush1.msra.mxu0 0.0
        %1314 = vmatprep.subr.mxu0 0.0
        %1315 = vmatpush1.msra.mxu0 0.0
        %1316 = vmatprep.subr.mxu0 0.0
        %1317 = vmatpush1.msra.mxu0 0.0
        %1318 = vmatprep.subr.mxu0 0.0
        %1319 = vmatpush1.msra.mxu0 0.0
        %1320 = vmatprep.subr.mxu0 0.0
        %1321 = vmatpush1.msra.mxu0 0.0
        %1322 = vmatprep.subr.mxu0 0.0
        %1323 = vmatpush1.msra.mxu0 0.0
        %1324 = vmatprep.subr.mxu0 0.0
        %1325 = vmatpush1.msra.mxu0 0.0
        %1326 = vmatprep.subr.mxu0 0.0
        %1327 = vmatpush1.msra.mxu0 0.0
        %1328 = vmatprep.subr.mxu0 0.0
        %1329 = vmatpush1.msra.mxu0 0.0
        %1330 = vmatprep.subr.mxu0 0.0
        %1331 = vmatpush1.msra.mxu0 0.0
        %1332 = vmatprep.subr.mxu0 0.0
        %1333 = vmatpush1.msra.mxu0 0.0
        %1334 = vmatprep.subr.mxu0 0.0
        %1335 = vmatpush1.msra.mxu0 0.0
        %1336 = vmatprep.subr.mxu0 0.0
        %1337 = vmatpush1.msra.mxu0 0.0
        %1338 = vmatprep.subr.mxu0 0.0
        %1339 = vmatpush1.msra.mxu0 0.0
        %1340 = vmatprep.subr.mxu0 0.0
        %1341 = vmatpush1.msra.mxu0 0.0
        %1342 = vmatprep.subr.mxu0 0.0
        %1343 = vmatpush1.msra.mxu0 0.0
        %1344 = vmatprep.subr.mxu0 0.0
        %1345 = vmatpush1.msra.mxu0 0.0
        %1346 = vmatprep.subr.mxu0 0.0
        %1347 = vmatpush1.msra.mxu0 0.0
        %1348 = vmatprep.subr.mxu0 0.0
        %1349 = vmatpush1.msra.mxu0 0.0
        %1350 = vmatprep.subr.mxu0 0.0
        %1351 = vmatpush1.msra.mxu0 0.0
        %1352 = vmatprep.mubr.f32.mxu0 0.0
        %1353 = vmatmul.mubr.f32.gmra.mrb[0].mxu0 %v1286
        %v1354 = vpop.f32.mrb[0].mxu0
        %v1355 = vadd.f32 %v1282, %v1354
        %v1356 = vpop.f32.mrb[0].mxu0
        %1357 = vdwg.mxu0
        %1358 = vrot.lane.b32.xlu0 %v868, 112
        %v1359 = vpop.permute.xlu0 %1358
        %1360 = vrot.lane.b32.xlu0 %v869, 112
        %v1361 = vpop.permute.xlu0 %1360
        %v1362 = vsel %vm878, %v1359, 0
        %v1364 = vsel %vm878, %v1361, 0
        %1366 = vmatprep.subr.mxu0 0.0
        %1367 = vmatpush1.xpose.msra.mxu0 %v1364
        %1368 = vmatprep.subr.mxu0 0.0
        %1369 = vmatpush1.xpose.msra.mxu0 0.0
        %1370 = vmatprep.subr.mxu0 0.0
        %1371 = vmatpush1.xpose.msra.mxu0 0.0
        %1372 = vmatprep.subr.mxu0 0.0
        %1373 = vmatpush1.xpose.msra.mxu0 0.0
        %1374 = vmatprep.subr.mxu0 0.0
        %1375 = vmatpush1.xpose.msra.mxu0 0.0
        %1376 = vmatprep.subr.mxu0 0.0
        %1377 = vmatpush1.xpose.msra.mxu0 0.0
        %1378 = vmatprep.subr.mxu0 0.0
        %1379 = vmatpush1.xpose.msra.mxu0 0.0
        %1380 = vmatprep.subr.mxu0 0.0
        %1381 = vmatpush1.xpose.msra.mxu0 0.0
        %1382 = vmatprep.subr.mxu0 0.0
        %1383 = vmatpush1.xpose.msra.mxu0 0.0
        %1384 = vmatprep.subr.mxu0 0.0
        %1385 = vmatpush1.xpose.msra.mxu0 0.0
        %1386 = vmatprep.subr.mxu0 0.0
        %1387 = vmatpush1.xpose.msra.mxu0 0.0
        %1388 = vmatprep.subr.mxu0 0.0
        %1389 = vmatpush1.xpose.msra.mxu0 0.0
        %1390 = vmatprep.subr.mxu0 0.0
        %1391 = vmatpush1.xpose.msra.mxu0 0.0
        %1392 = vmatprep.subr.mxu0 0.0
        %1393 = vmatpush1.xpose.msra.mxu0 0.0
        %1394 = vmatprep.subr.mxu0 0.0
        %1395 = vmatpush1.xpose.msra.mxu0 0.0
        %1396 = vmatprep.subr.mxu0 0.0
        %1397 = vmatpush1.xpose.msra.mxu0 0.0
        %1398 = vmatprep.subr.mxu0 0.0
        %1399 = vmatpush1.xpose.msra.mxu0 0.0
        %1400 = vmatprep.subr.mxu0 0.0
        %1401 = vmatpush1.xpose.msra.mxu0 0.0
        %1402 = vmatprep.subr.mxu0 0.0
        %1403 = vmatpush1.xpose.msra.mxu0 0.0
        %1404 = vmatprep.subr.mxu0 0.0
        %1405 = vmatpush1.xpose.msra.mxu0 0.0
        %1406 = vmatprep.subr.mxu0 0.0
        %1407 = vmatpush1.xpose.msra.mxu0 0.0
        %1408 = vmatprep.subr.mxu0 0.0
        %1409 = vmatpush1.xpose.msra.mxu0 0.0
        %1410 = vmatprep.subr.mxu0 0.0
        %1411 = vmatpush1.xpose.msra.mxu0 0.0
        %1412 = vmatprep.subr.mxu0 0.0
        %1413 = vmatpush1.xpose.msra.mxu0 0.0
        %1414 = vmatprep.subr.mxu0 0.0
        %1415 = vmatpush1.xpose.msra.mxu0 0.0
        %1416 = vmatprep.subr.mxu0 0.0
        %1417 = vmatpush1.xpose.msra.mxu0 0.0
        %1418 = vmatprep.subr.mxu0 0.0
        %1419 = vmatpush1.xpose.msra.mxu0 0.0
        %1420 = vmatprep.subr.mxu0 0.0
        %1421 = vmatpush1.xpose.msra.mxu0 0.0
        %1422 = vmatprep.subr.mxu0 0.0
        %1423 = vmatpush1.xpose.msra.mxu0 0.0
        %1424 = vmatprep.subr.mxu0 0.0
        %1425 = vmatpush1.xpose.msra.mxu0 0.0
        %1426 = vmatprep.subr.mxu0 0.0
        %1427 = vmatpush1.xpose.msra.mxu0 0.0
        %1428 = vmatprep.subr.mxu0 0.0
        %1429 = vmatpush1.xpose.msra.mxu0 0.0
        %1430 = vmatprep.mubr.f32.mxu0 0.0
        %1431 = vmatmul.mubr.f32.gmra.mrb[0].mxu0 %v1362
        %v1432 = vpop.f32.mrb[0].mxu0
        %v1433 = vadd.f32 0.0, %v1432
        %v1434 = vpop.f32.mrb[0].mxu0
        %1435 = vdwg.mxu0
        %v1436 = vsel %vm877, %v1433, -inf
        %v1437 = vsel %vm878, %v1436, -inf
        %1438 = vmax.xlane.f32.xlu0 %v1437
        %v1439 = vpop.xlane.xlu0 %1438
        %v1440 = vsub.f32 %v1436, %v1439
        %v1441 = vmul.f32 %v1440, 1.442695
        %v1442 = vpow.pop %v1441
        %v1443 = vsel %vm878, %v1442, 0.0
        %1444 = vadd.xlane.f32.xlu0 %v1443
        %v1445 = vpop.xlane.xlu0 %1444
        %v1446 = vrcp.pop %v1445
        %v1447 = vmul.f32 %v1442, %v1446
        %s1448 = scalar_lea.vmem %s734, 16 [#allocation29]
        %1449 = vst.msk [vmem:[%s1448] sm:$0xff] %vm878, %v1447
        %1450 = vrot.lane.b32.xlu0 %v870, 112
        %v1451 = vpop.permute.xlu0 %1450
        %v1454 = vsel %vm878, %v1447, 0
        %1456 = vmatprep.subr.mxu0 0.0
        %1457 = vmatpush1.msra.mxu0 %v1451
        %1458 = vmatprep.subr.mxu0 0.0
        %1459 = vmatpush1.msra.mxu0 0.0
        %1460 = vmatprep.subr.mxu0 0.0
        %1461 = vmatpush1.msra.mxu0 0.0
        %1462 = vmatprep.subr.mxu0 0.0
        %1463 = vmatpush1.msra.mxu0 0.0
        %1464 = vmatprep.subr.mxu0 0.0
        %1465 = vmatpush1.msra.mxu0 0.0
        %1466 = vmatprep.subr.mxu0 0.0
        %1467 = vmatpush1.msra.mxu0 0.0
        %1468 = vmatprep.subr.mxu0 0.0
        %1469 = vmatpush1.msra.mxu0 0.0
        %1470 = vmatprep.subr.mxu0 0.0
        %1471 = vmatpush1.msra.mxu0 0.0
        %1472 = vmatprep.subr.mxu0 0.0
        %1473 = vmatpush1.msra.mxu0 0.0
        %1474 = vmatprep.subr.mxu0 0.0
        %1475 = vmatpush1.msra.mxu0 0.0
        %1476 = vmatprep.subr.mxu0 0.0
        %1477 = vmatpush1.msra.mxu0 0.0
        %1478 = vmatprep.subr.mxu0 0.0
        %1479 = vmatpush1.msra.mxu0 0.0
        %1480 = vmatprep.subr.mxu0 0.0
        %1481 = vmatpush1.msra.mxu0 0.0
        %1482 = vmatprep.subr.mxu0 0.0
        %1483 = vmatpush1.msra.mxu0 0.0
        %1484 = vmatprep.subr.mxu0 0.0
        %1485 = vmatpush1.msra.mxu0 0.0
        %1486 = vmatprep.subr.mxu0 0.0
        %1487 = vmatpush1.msra.mxu0 0.0
        %1488 = vmatprep.subr.mxu0 0.0
        %1489 = vmatpush1.msra.mxu0 0.0
        %1490 = vmatprep.subr.mxu0 0.0
        %1491 = vmatpush1.msra.mxu0 0.0
        %1492 = vmatprep.subr.mxu0 0.0
        %1493 = vmatpush1.msra.mxu0 0.0
        %1494 = vmatprep.subr.mxu0 0.0
        %1495 = vmatpush1.msra.mxu0 0.0
        %1496 = vmatprep.subr.mxu0 0.0
        %1497 = vmatpush1.msra.mxu0 0.0
        %1498 = vmatprep.subr.mxu0 0.0
        %1499 = vmatpush1.msra.mxu0 0.0
        %1500 = vmatprep.subr.mxu0 0.0
        %1501 = vmatpush1.msra.mxu0 0.0
        %1502 = vmatprep.subr.mxu0 0.0
        %1503 = vmatpush1.msra.mxu0 0.0
        %1504 = vmatprep.subr.mxu0 0.0
        %1505 = vmatpush1.msra.mxu0 0.0
        %1506 = vmatprep.subr.mxu0 0.0
        %1507 = vmatpush1.msra.mxu0 0.0
        %1508 = vmatprep.subr.mxu0 0.0
        %1509 = vmatpush1.msra.mxu0 0.0
        %1510 = vmatprep.subr.mxu0 0.0
        %1511 = vmatpush1.msra.mxu0 0.0
        %1512 = vmatprep.subr.mxu0 0.0
        %1513 = vmatpush1.msra.mxu0 0.0
        %1514 = vmatprep.subr.mxu0 0.0
        %1515 = vmatpush1.msra.mxu0 0.0
        %1516 = vmatprep.subr.mxu0 0.0
        %1517 = vmatpush1.msra.mxu0 0.0
        %1518 = vmatprep.subr.mxu0 0.0
        %1519 = vmatpush1.msra.mxu0 0.0
        %1520 = vmatprep.mubr.f32.mxu0 0.0
        %1521 = vmatmul.mubr.f32.gmra.mrb[0].mxu0 %v1454
        %v1522 = vpop.f32.mrb[0].mxu0
        %v1523 = vadd.f32 0.0, %v1522
        %v1524 = vpop.f32.mrb[0].mxu0
        %1525 = vdwg.mxu0
        %v1526 = vld [vmem:[#allocation16 + $0x10] sm:$0xff]
        %v1528 = vsel %vm878, %v1523, 0
        %1530 = vmatprep.subr.mxu0 0.0
        %1531 = vmatpush1.msra.mxu0 %v1526
        %1532 = vmatprep.subr.mxu0 0.0
        %1533 = vmatpush1.msra.mxu0 0.0
        %1534 = vmatprep.subr.mxu0 0.0
        %1535 = vmatpush1.msra.mxu0 0.0
        %1536 = vmatprep.subr.mxu0 0.0
        %1537 = vmatpush1.msra.mxu0 0.0
        %1538 = vmatprep.subr.mxu0 0.0
        %1539 = vmatpush1.msra.mxu0 0.0
        %1540 = vmatprep.subr.mxu0 0.0
        %1541 = vmatpush1.msra.mxu0 0.0
        %1542 = vmatprep.subr.mxu0 0.0
        %1543 = vmatpush1.msra.mxu0 0.0
        %1544 = vmatprep.subr.mxu0 0.0
        %1545 = vmatpush1.msra.mxu0 0.0
        %1546 = vmatprep.subr.mxu0 0.0
        %1547 = vmatpush1.msra.mxu0 0.0
        %1548 = vmatprep.subr.mxu0 0.0
        %1549 = vmatpush1.msra.mxu0 0.0
        %1550 = vmatprep.subr.mxu0 0.0
        %1551 = vmatpush1.msra.mxu0 0.0
        %1552 = vmatprep.subr.mxu0 0.0
        %1553 = vmatpush1.msra.mxu0 0.0
        %1554 = vmatprep.subr.mxu0 0.0
        %1555 = vmatpush1.msra.mxu0 0.0
        %1556 = vmatprep.subr.mxu0 0.0
        %1557 = vmatpush1.msra.mxu0 0.0
        %1558 = vmatprep.subr.mxu0 0.0
        %1559 = vmatpush1.msra.mxu0 0.0
        %1560 = vmatprep.subr.mxu0 0.0
        %1561 = vmatpush1.msra.mxu0 0.0
        %1562 = vmatprep.subr.mxu0 0.0
        %1563 = vmatpush1.msra.mxu0 0.0
        %1564 = vmatprep.subr.mxu0 0.0
        %1565 = vmatpush1.msra.mxu0 0.0
        %1566 = vmatprep.subr.mxu0 0.0
        %1567 = vmatpush1.msra.mxu0 0.0
        %1568 = vmatprep.subr.mxu0 0.0
        %1569 = vmatpush1.msra.mxu0 0.0
        %1570 = vmatprep.subr.mxu0 0.0
        %1571 = vmatpush1.msra.mxu0 0.0
        %1572 = vmatprep.subr.mxu0 0.0
        %1573 = vmatpush1.msra.mxu0 0.0
        %1574 = vmatprep.subr.mxu0 0.0
        %1575 = vmatpush1.msra.mxu0 0.0
        %1576 = vmatprep.subr.mxu0 0.0
        %1577 = vmatpush1.msra.mxu0 0.0
        %1578 = vmatprep.subr.mxu0 0.0
        %1579 = vmatpush1.msra.mxu0 0.0
        %1580 = vmatprep.subr.mxu0 0.0
        %1581 = vmatpush1.msra.mxu0 0.0
        %1582 = vmatprep.subr.mxu0 0.0
        %1583 = vmatpush1.msra.mxu0 0.0
        %1584 = vmatprep.subr.mxu0 0.0
        %1585 = vmatpush1.msra.mxu0 0.0
        %1586 = vmatprep.subr.mxu0 0.0
        %1587 = vmatpush1.msra.mxu0 0.0
        %1588 = vmatprep.subr.mxu0 0.0
        %1589 = vmatpush1.msra.mxu0 0.0
        %1590 = vmatprep.subr.mxu0 0.0
        %1591 = vmatpush1.msra.mxu0 0.0
        %1592 = vmatprep.subr.mxu0 0.0
        %1593 = vmatpush1.msra.mxu0 0.0
        %1594 = vmatprep.mubr.f32.mxu0 0.0
        %1595 = vmatmul.mubr.f32.gmra.mrb[0].mxu0 %v1528
        %v1596 = vpop.f32.mrb[0].mxu0
        %v1597 = vadd.f32 0.0, %v1596
        %v1598 = vpop.f32.mrb[0].mxu0
        %1599 = vdwg.mxu0
        %v1600 = vadd.f32 %v1355, %v1597
        %1601 = vrot.lane.b32.xlu0 %v868, 104
        %v1602 = vpop.permute.xlu0 %1601
        %1603 = vrot.lane.b32.xlu0 %v869, 104
        %v1604 = vpop.permute.xlu0 %1603
        %v1605 = vsel %vm878, %v1602, 0
        %v1607 = vsel %vm878, %v1604, 0
        %1609 = vmatprep.subr.mxu0 0.0
        %1610 = vmatpush1.xpose.msra.mxu0 %v1607
        %1611 = vmatprep.subr.mxu0 0.0
        %1612 = vmatpush1.xpose.msra.mxu0 0.0
        %1613 = vmatprep.subr.mxu0 0.0
        %1614 = vmatpush1.xpose.msra.mxu0 0.0
        %1615 = vmatprep.subr.mxu0 0.0
        %1616 = vmatpush1.xpose.msra.mxu0 0.0
        %1617 = vmatprep.subr.mxu0 0.0
        %1618 = vmatpush1.xpose.msra.mxu0 0.0
        %1619 = vmatprep.subr.mxu0 0.0
        %1620 = vmatpush1.xpose.msra.mxu0 0.0
        %1621 = vmatprep.subr.mxu0 0.0
        %1622 = vmatpush1.xpose.msra.mxu0 0.0
        %1623 = vmatprep.subr.mxu0 0.0
        %1624 = vmatpush1.xpose.msra.mxu0 0.0
        %1625 = vmatprep.subr.mxu0 0.0
        %1626 = vmatpush1.xpose.msra.mxu0 0.0
        %1627 = vmatprep.subr.mxu0 0.0
        %1628 = vmatpush1.xpose.msra.mxu0 0.0
        %1629 = vmatprep.subr.mxu0 0.0
        %1630 = vmatpush1.xpose.msra.mxu0 0.0
        %1631 = vmatprep.subr.mxu0 0.0
        %1632 = vmatpush1.xpose.msra.mxu0 0.0
        %1633 = vmatprep.subr.mxu0 0.0
        %1634 = vmatpush1.xpose.msra.mxu0 0.0
        %1635 = vmatprep.subr.mxu0 0.0
        %1636 = vmatpush1.xpose.msra.mxu0 0.0
        %1637 = vmatprep.subr.mxu0 0.0
        %1638 = vmatpush1.xpose.msra.mxu0 0.0
        %1639 = vmatprep.subr.mxu0 0.0
        %1640 = vmatpush1.xpose.msra.mxu0 0.0
        %1641 = vmatprep.subr.mxu0 0.0
        %1642 = vmatpush1.xpose.msra.mxu0 0.0
        %1643 = vmatprep.subr.mxu0 0.0
        %1644 = vmatpush1.xpose.msra.mxu0 0.0
        %1645 = vmatprep.subr.mxu0 0.0
        %1646 = vmatpush1.xpose.msra.mxu0 0.0
        %1647 = vmatprep.subr.mxu0 0.0
        %1648 = vmatpush1.xpose.msra.mxu0 0.0
        %1649 = vmatprep.subr.mxu0 0.0
        %1650 = vmatpush1.xpose.msra.mxu0 0.0
        %1651 = vmatprep.subr.mxu0 0.0
        %1652 = vmatpush1.xpose.msra.mxu0 0.0
        %1653 = vmatprep.subr.mxu0 0.0
        %1654 = vmatpush1.xpose.msra.mxu0 0.0
        %1655 = vmatprep.subr.mxu0 0.0
        %1656 = vmatpush1.xpose.msra.mxu0 0.0
        %1657 = vmatprep.subr.mxu0 0.0
        %1658 = vmatpush1.xpose.msra.mxu0 0.0
        %1659 = vmatprep.subr.mxu0 0.0
        %1660 = vmatpush1.xpose.msra.mxu0 0.0
        %1661 = vmatprep.subr.mxu0 0.0
        %1662 = vmatpush1.xpose.msra.mxu0 0.0
        %1663 = vmatprep.subr.mxu0 0.0
        %1664 = vmatpush1.xpose.msra.mxu0 0.0
        %1665 = vmatprep.subr.mxu0 0.0
        %1666 = vmatpush1.xpose.msra.mxu0 0.0
        %1667 = vmatprep.subr.mxu0 0.0
        %1668 = vmatpush1.xpose.msra.mxu0 0.0
        %1669 = vmatprep.subr.mxu0 0.0
        %1670 = vmatpush1.xpose.msra.mxu0 0.0
        %1671 = vmatprep.subr.mxu0 0.0
        %1672 = vmatpush1.xpose.msra.mxu0 0.0
        %1673 = vmatprep.mubr.f32.mxu0 0.0
        %1674 = vmatmul.mubr.f32.gmra.mrb[0].mxu0 %v1605
        %v1675 = vpop.f32.mrb[0].mxu0
        %v1676 = vadd.f32 0.0, %v1675
        %v1677 = vpop.f32.mrb[0].mxu0
        %1678 = vdwg.mxu0
        %v1679 = vsel %vm877, %v1676, -inf
        %v1680 = vsel %vm878, %v1679, -inf
        %1681 = vmax.xlane.f32.xlu0 %v1680
        %v1682 = vpop.xlane.xlu0 %1681
        %v1683 = vsub.f32 %v1679, %v1682
        %v1684 = vmul.f32 %v1683, 1.442695
        %v1685 = vpow.pop %v1684
        %v1686 = vsel %vm878, %v1685, 0.0
        %1687 = vadd.xlane.f32.xlu0 %v1686
        %v1688 = vpop.xlane.xlu0 %1687
        %v1689 = vrcp.pop %v1688
        %v1690 = vmul.f32 %v1685, %v1689
        %s1691 = scalar_lea.vmem %s734, 24 [#allocation29]
        %1692 = vst.msk [vmem:[%s1691] sm:$0xff] %vm878, %v1690
        %1693 = vrot.lane.b32.xlu0 %v870, 104
        %v1694 = vpop.permute.xlu0 %1693
        %v1697 = vsel %vm878, %v1690, 0
        %1699 = vmatprep.subr.mxu0 0.0
        %1700 = vmatpush1.msra.mxu0 %v1694
        %1701 = vmatprep.subr.mxu0 0.0
        %1702 = vmatpush1.msra.mxu0 0.0
        %1703 = vmatprep.subr.mxu0 0.0
        %1704 = vmatpush1.msra.mxu0 0.0
        %1705 = vmatprep.subr.mxu0 0.0
        %1706 = vmatpush1.msra.mxu0 0.0
        %1707 = vmatprep.subr.mxu0 0.0
        %1708 = vmatpush1.msra.mxu0 0.0
        %1709 = vmatprep.subr.mxu0 0.0
        %1710 = vmatpush1.msra.mxu0 0.0
        %1711 = vmatprep.subr.mxu0 0.0
        %1712 = vmatpush1.msra.mxu0 0.0
        %1713 = vmatprep.subr.mxu0 0.0
        %1714 = vmatpush1.msra.mxu0 0.0
        %1715 = vmatprep.subr.mxu0 0.0
        %1716 = vmatpush1.msra.mxu0 0.0
        %1717 = vmatprep.subr.mxu0 0.0
        %1718 = vmatpush1.msra.mxu0 0.0
        %1719 = vmatprep.subr.mxu0 0.0
        %1720 = vmatpush1.msra.mxu0 0.0
        %1721 = vmatprep.subr.mxu0 0.0
        %1722 = vmatpush1.msra.mxu0 0.0
        %1723 = vmatprep.subr.mxu0 0.0
        %1724 = vmatpush1.msra.mxu0 0.0
        %1725 = vmatprep.subr.mxu0 0.0
        %1726 = vmatpush1.msra.mxu0 0.0
        %1727 = vmatprep.subr.mxu0 0.0
        %1728 = vmatpush1.msra.mxu0 0.0
        %1729 = vmatprep.subr.mxu0 0.0
        %1730 = vmatpush1.msra.mxu0 0.0
        %1731 = vmatprep.subr.mxu0 0.0
        %1732 = vmatpush1.msra.mxu0 0.0
        %1733 = vmatprep.subr.mxu0 0.0
        %1734 = vmatpush1.msra.mxu0 0.0
        %1735 = vmatprep.subr.mxu0 0.0
        %1736 = vmatpush1.msra.mxu0 0.0
        %1737 = vmatprep.subr.mxu0 0.0
        %1738 = vmatpush1.msra.mxu0 0.0
        %1739 = vmatprep.subr.mxu0 0.0
        %1740 = vmatpush1.msra.mxu0 0.0
        %1741 = vmatprep.subr.mxu0 0.0
        %1742 = vmatpush1.msra.mxu0 0.0
        %1743 = vmatprep.subr.mxu0 0.0
        %1744 = vmatpush1.msra.mxu0 0.0
        %1745 = vmatprep.subr.mxu0 0.0
        %1746 = vmatpush1.msra.mxu0 0.0
        %1747 = vmatprep.subr.mxu0 0.0
        %1748 = vmatpush1.msra.mxu0 0.0
        %1749 = vmatprep.subr.mxu0 0.0
        %1750 = vmatpush1.msra.mxu0 0.0
        %1751 = vmatprep.subr.mxu0 0.0
        %1752 = vmatpush1.msra.mxu0 0.0
        %1753 = vmatprep.subr.mxu0 0.0
        %1754 = vmatpush1.msra.mxu0 0.0
        %1755 = vmatprep.subr.mxu0 0.0
        %1756 = vmatpush1.msra.mxu0 0.0
        %1757 = vmatprep.subr.mxu0 0.0
        %1758 = vmatpush1.msra.mxu0 0.0
        %1759 = vmatprep.subr.mxu0 0.0
        %1760 = vmatpush1.msra.mxu0 0.0
        %1761 = vmatprep.subr.mxu0 0.0
        %1762 = vmatpush1.msra.mxu0 0.0
        %1763 = vmatprep.mubr.f32.mxu0 0.0
        %1764 = vmatmul.mubr.f32.gmra.mrb[0].mxu0 %v1697
        %v1765 = vpop.f32.mrb[0].mxu0
        %v1766 = vadd.f32 0.0, %v1765
        %v1767 = vpop.f32.mrb[0].mxu0
        %1768 = vdwg.mxu0
        %v1769 = vld [vmem:[#allocation16 + $0x18] sm:$0xff]
        %v1771 = vsel %vm878, %v1766, 0
        %1773 = vmatprep.subr.mxu0 0.0
        %1774 = vmatpush1.msra.mxu0 %v1769
        %1775 = vmatprep.subr.mxu0 0.0
        %1776 = vmatpush1.msra.mxu0 0.0
        %1777 = vmatprep.subr.mxu0 0.0
        %1778 = vmatpush1.msra.mxu0 0.0
        %1779 = vmatprep.subr.mxu0 0.0
        %1780 = vmatpush1.msra.mxu0 0.0
        %1781 = vmatprep.subr.mxu0 0.0
        %1782 = vmatpush1.msra.mxu0 0.0
        %1783 = vmatprep.subr.mxu0 0.0
        %1784 = vmatpush1.msra.mxu0 0.0
        %1785 = vmatprep.subr.mxu0 0.0
        %1786 = vmatpush1.msra.mxu0 0.0
        %1787 = vmatprep.subr.mxu0 0.0
        %1788 = vmatpush1.msra.mxu0 0.0
        %1789 = vmatprep.subr.mxu0 0.0
        %1790 = vmatpush1.msra.mxu0 0.0
        %1791 = vmatprep.subr.mxu0 0.0
        %1792 = vmatpush1.msra.mxu0 0.0
        %1793 = vmatprep.subr.mxu0 0.0
        %1794 = vmatpush1.msra.mxu0 0.0
        %1795 = vmatprep.subr.mxu0 0.0
        %1796 = vmatpush1.msra.mxu0 0.0
        %1797 = vmatprep.subr.mxu0 0.0
        %1798 = vmatpush1.msra.mxu0 0.0
        %1799 = vmatprep.subr.mxu0 0.0
        %1800 = vmatpush1.msra.mxu0 0.0
        %1801 = vmatprep.subr.mxu0 0.0
        %1802 = vmatpush1.msra.mxu0 0.0
        %1803 = vmatprep.subr.mxu0 0.0
        %1804 = vmatpush1.msra.mxu0 0.0
        %1805 = vmatprep.subr.mxu0 0.0
        %1806 = vmatpush1.msra.mxu0 0.0
        %1807 = vmatprep.subr.mxu0 0.0
        %1808 = vmatpush1.msra.mxu0 0.0
        %1809 = vmatprep.subr.mxu0 0.0
        %1810 = vmatpush1.msra.mxu0 0.0
        %1811 = vmatprep.subr.mxu0 0.0
        %1812 = vmatpush1.msra.mxu0 0.0
        %1813 = vmatprep.subr.mxu0 0.0
        %1814 = vmatpush1.msra.mxu0 0.0
        %1815 = vmatprep.subr.mxu0 0.0
        %1816 = vmatpush1.msra.mxu0 0.0
        %1817 = vmatprep.subr.mxu0 0.0
        %1818 = vmatpush1.msra.mxu0 0.0
        %1819 = vmatprep.subr.mxu0 0.0
        %1820 = vmatpush1.msra.mxu0 0.0
        %1821 = vmatprep.subr.mxu0 0.0
        %1822 = vmatpush1.msra.mxu0 0.0
        %1823 = vmatprep.subr.mxu0 0.0
        %1824 = vmatpush1.msra.mxu0 0.0
        %1825 = vmatprep.subr.mxu0 0.0
        %1826 = vmatpush1.msra.mxu0 0.0
        %1827 = vmatprep.subr.mxu0 0.0
        %1828 = vmatpush1.msra.mxu0 0.0
        %1829 = vmatprep.subr.mxu0 0.0
        %1830 = vmatpush1.msra.mxu0 0.0
        %1831 = vmatprep.subr.mxu0 0.0
        %1832 = vmatpush1.msra.mxu0 0.0
        %1833 = vmatprep.subr.mxu0 0.0
        %1834 = vmatpush1.msra.mxu0 0.0
        %1835 = vmatprep.subr.mxu0 0.0
        %1836 = vmatpush1.msra.mxu0 0.0
        %1837 = vmatprep.mubr.f32.mxu0 0.0
        %1838 = vmatmul.mubr.f32.gmra.mrb[0].mxu0 %v1771
        %v1839 = vpop.f32.mrb[0].mxu0
        %v1840 = vadd.f32 0.0, %v1839
        %v1841 = vpop.f32.mrb[0].mxu0
        %1842 = vdwg.mxu0
        %v1843 = vadd.f32 %v1600, %v1840
        %v1844 = vadd.f32 %v866, %v1843
        %v1845 = vld [vmem:[#allocation17] sm:$0x1]
        %v1847 = vlaneseq
        %v1848 = vshrl.u32 %v1847, 7
        %v1849 = vsub.s32 0, %v1848
        %v1850 = vrot.slane %v1845, %v1849
        %v1852 = vadd.f32 %v1844, %v1850
        %v1853 = vld [vmem:[#allocation19] sm:$0x1]
        %v1854 = vld [vmem:[#allocation20] sm:$0x1]
        %vm1855 = vcmask 261120
        %v1856 = vsel %vm1855, %v1852, 0.0
        %1857 = vadd.xlane.f32.xlu0 %v1856
        %v1858 = vpop.xlane.xlu0 %1857
        %v1859 = vrcp.pop 32.0
        %v1860 = vmul.f32 %v1858, %v1859
        %v1861 = vsub.f32 %v1852, %v1860
        %v1862 = vmul.f32 %v1861, %v1861
        %v1863 = vsel %vm1855, %v1862, 0.0
        %1864 = vadd.xlane.f32.xlu0 %v1863
        %v1865 = vpop.xlane.xlu0 %1864
        %v1866 = vmul.f32 %v1865, %v1859
        %v1867 = vadd.f32 %v1866, 1e-05
        %v1868 = vrsqrt.pop %v1867
        %v1869 = vmul.f32 %v1861, %v1868
        %v1871 = vlaneseq
        %v1872 = vshrl.u32 %v1871, 7
        %v1873 = vsub.s32 0, %v1872
        %v1874 = vrot.slane %v1853, %v1873
        %v1876 = vmul.f32 %v1869, %v1874
        %v1878 = vlaneseq
        %v1879 = vshrl.u32 %v1878, 7
        %v1880 = vsub.s32 0, %v1879
        %v1881 = vrot.slane %v1854, %v1880
        %v1883 = vadd.f32 %v1876, %v1881
        %v1884 = vld [vmem:[#allocation22] sm:$0xff]
        %v1885 = vld [vmem:[#allocation22 + $0x8] sm:$0xff]
        %v1886 = vld [vmem:[#allocation22 + $0x10] sm:$0xff]
        %v1887 = vld [vmem:[#allocation22 + $0x18] sm:$0xff]
        %v1888 = vld [vmem:[#allocation23] sm:$0x1]
        %v1890 = vlaneseq
        %v1891 = vshrl.u32 %v1890, 7
        %v1892 = vsub.s32 0, %v1891
        %v1893 = vrot.slane %v1888, %v1892
        %v1896 = vsel %vm1855, %v1883, 0
        %1898 = vmatprep.subr.mxu0 0.0
        %1899 = vmatpush1.msra.mxu0 %v1884
        %1900 = vmatprep.subr.mxu0 0.0
        %1901 = vmatpush1.msra.mxu0 %v1885
        %1902 = vmatprep.subr.mxu0 0.0
        %1903 = vmatpush1.msra.mxu0 %v1886
        %1904 = vmatprep.subr.mxu0 0.0
        %1905 = vmatpush1.msra.mxu0 %v1887
        %1906 = vmatprep.subr.mxu0 0.0
        %1907 = vmatpush1.msra.mxu0 0.0
        %1908 = vmatprep.subr.mxu0 0.0
        %1909 = vmatpush1.msra.mxu0 0.0
        %1910 = vmatprep.subr.mxu0 0.0
        %1911 = vmatpush1.msra.mxu0 0.0
        %1912 = vmatprep.subr.mxu0 0.0
        %1913 = vmatpush1.msra.mxu0 0.0
        %1914 = vmatprep.subr.mxu0 0.0
        %1915 = vmatpush1.msra.mxu0 0.0
        %1916 = vmatprep.subr.mxu0 0.0
        %1917 = vmatpush1.msra.mxu0 0.0
        %1918 = vmatprep.subr.mxu0 0.0
        %1919 = vmatpush1.msra.mxu0 0.0
        %1920 = vmatprep.subr.mxu0 0.0
        %1921 = vmatpush1.msra.mxu0 0.0
        %1922 = vmatprep.subr.mxu0 0.0
        %1923 = vmatpush1.msra.mxu0 0.0
        %1924 = vmatprep.subr.mxu0 0.0
        %1925 = vmatpush1.msra.mxu0 0.0
        %1926 = vmatprep.subr.mxu0 0.0
        %1927 = vmatpush1.msra.mxu0 0.0
        %1928 = vmatprep.subr.mxu0 0.0
        %1929 = vmatpush1.msra.mxu0 0.0
        %1930 = vmatprep.subr.mxu0 0.0
        %1931 = vmatpush1.msra.mxu0 0.0
        %1932 = vmatprep.subr.mxu0 0.0
        %1933 = vmatpush1.msra.mxu0 0.0
        %1934 = vmatprep.subr.mxu0 0.0
        %1935 = vmatpush1.msra.mxu0 0.0
        %1936 = vmatprep.subr.mxu0 0.0
        %1937 = vmatpush1.msra.mxu0 0.0
        %1938 = vmatprep.subr.mxu0 0.0
        %1939 = vmatpush1.msra.mxu0 0.0
        %1940 = vmatprep.subr.mxu0 0.0
        %1941 = vmatpush1.msra.mxu0 0.0
        %1942 = vmatprep.subr.mxu0 0.0
        %1943 = vmatpush1.msra.mxu0 0.0
        %1944 = vmatprep.subr.mxu0 0.0
        %1945 = vmatpush1.msra.mxu0 0.0
        %1946 = vmatprep.subr.mxu0 0.0
        %1947 = vmatpush1.msra.mxu0 0.0
        %1948 = vmatprep.subr.mxu0 0.0
        %1949 = vmatpush1.msra.mxu0 0.0
        %1950 = vmatprep.subr.mxu0 0.0
        %1951 = vmatpush1.msra.mxu0 0.0
        %1952 = vmatprep.subr.mxu0 0.0
        %1953 = vmatpush1.msra.mxu0 0.0
        %1954 = vmatprep.subr.mxu0 0.0
        %1955 = vmatpush1.msra.mxu0 0.0
        %1956 = vmatprep.subr.mxu0 0.0
        %1957 = vmatpush1.msra.mxu0 0.0
        %1958 = vmatprep.subr.mxu0 0.0
        %1959 = vmatpush1.msra.mxu0 0.0
        %1960 = vmatprep.subr.mxu0 0.0
        %1961 = vmatpush1.msra.mxu0 0.0
        %1962 = vmatprep.mubr.f32.mxu0 0.0
        %1963 = vmatmul.mubr.f32.gmra.mrb[0].mxu0 %v1896
        %v1964 = vpop.f32.mrb[0].mxu0
        %v1965 = vadd.f32 %v1893, %v1964
        %v1966 = vpop.f32.mrb[0].mxu0
        %1967 = vdwg.mxu0
        %v1968 = vmul.f32 %v1965, 0.5
        %v1969 = vmul.f32 %v1965, 0.70710677
        %v1970 = verf.f32.pop %v1969
        %v1971 = vadd.f32 %v1970, 1.0
        %v1972 = vmul.f32 %v1968, %v1971
        %v1973 = vld [vmem:[#allocation25] sm:$0xff]
        %v1974 = vld [vmem:[#allocation25 + $0x8] sm:$0xff]
        %v1975 = vld [vmem:[#allocation25 + $0x10] sm:$0xff]
        %v1976 = vld [vmem:[#allocation25 + $0x18] sm:$0xff]
        %v1977 = vld [vmem:[#allocation25 + $0x20] sm:$0xff]
        %v1978 = vld [vmem:[#allocation25 + $0x28] sm:$0xff]
        %v1979 = vld [vmem:[#allocation25 + $0x30] sm:$0xff]
        %v1980 = vld [vmem:[#allocation25 + $0x38] sm:$0xff]
        %v1981 = vld [vmem:[#allocation25 + $0x40] sm:$0xff]
        %v1982 = vld [vmem:[#allocation25 + $0x48] sm:$0xff]
        %v1983 = vld [vmem:[#allocation25 + $0x50] sm:$0xff]
        %v1984 = vld [vmem:[#allocation25 + $0x58] sm:$0xff]
        %v1985 = vld [vmem:[#allocation25 + $0x60] sm:$0xff]
        %v1986 = vld [vmem:[#allocation25 + $0x68] sm:$0xff]
        %v1987 = vld [vmem:[#allocation25 + $0x70] sm:$0xff]
        %v1988 = vld [vmem:[#allocation25 + $0x78] sm:$0xff]
        %v1989 = vld [vmem:[#allocation26] sm:$0x1]
        %v1991 = vlaneseq
        %v1992 = vshrl.u32 %v1991, 7
        %v1993 = vsub.s32 0, %v1992
        %v1994 = vrot.slane %v1989, %v1993
        %1996 = vmatprep.subr.mxu0 0.0
        %1997 = vmatpush1.msra.mxu0 %v1973
        %1998 = vmatprep.subr.mxu0 0.0
        %1999 = vmatpush1.msra.mxu0 %v1974
        %2000 = vmatprep.subr.mxu0 0.0
        %2001 = vmatpush1.msra.mxu0 %v1975
        %2002 = vmatprep.subr.mxu0 0.0
        %2003 = vmatpush1.msra.mxu0 %v1976
        %2004 = vmatprep.subr.mxu0 0.0
        %2005 = vmatpush1.msra.mxu0 %v1977
        %2006 = vmatprep.subr.mxu0 0.0
        %2007 = vmatpush1.msra.mxu0 %v1978
        %2008 = vmatprep.subr.mxu0 0.0
        %2009 = vmatpush1.msra.mxu0 %v1979
        %2010 = vmatprep.subr.mxu0 0.0
        %2011 = vmatpush1.msra.mxu0 %v1980
        %2012 = vmatprep.subr.mxu0 0.0
        %2013 = vmatpush1.msra.mxu0 %v1981
        %2014 = vmatprep.subr.mxu0 0.0
        %2015 = vmatpush1.msra.mxu0 %v1982
        %2016 = vmatprep.subr.mxu0 0.0
        %2017 = vmatpush1.msra.mxu0 %v1983
        %2018 = vmatprep.subr.mxu0 0.0
        %2019 = vmatpush1.msra.mxu0 %v1984
        %2020 = vmatprep.subr.mxu0 0.0
        %2021 = vmatpush1.msra.mxu0 %v1985
        %2022 = vmatprep.subr.mxu0 0.0
        %2023 = vmatpush1.msra.mxu0 %v1986
        %2024 = vmatprep.subr.mxu0 0.0
        %2025 = vmatpush1.msra.mxu0 %v1987
        %2026 = vmatprep.subr.mxu0 0.0
        %2027 = vmatpush1.msra.mxu0 %v1988
        %2028 = vmatprep.subr.mxu0 0.0
        %2029 = vmatpush1.msra.mxu0 0.0
        %2030 = vmatprep.subr.mxu0 0.0
        %2031 = vmatpush1.msra.mxu0 0.0
        %2032 = vmatprep.subr.mxu0 0.0
        %2033 = vmatpush1.msra.mxu0 0.0
        %2034 = vmatprep.subr.mxu0 0.0
        %2035 = vmatpush1.msra.mxu0 0.0
        %2036 = vmatprep.subr.mxu0 0.0
        %2037 = vmatpush1.msra.mxu0 0.0
        %2038 = vmatprep.subr.mxu0 0.0
        %2039 = vmatpush1.msra.mxu0 0.0
        %2040 = vmatprep.subr.mxu0 0.0
        %2041 = vmatpush1.msra.mxu0 0.0
        %2042 = vmatprep.subr.mxu0 0.0
        %2043 = vmatpush1.msra.mxu0 0.0
        %2044 = vmatprep.subr.mxu0 0.0
        %2045 = vmatpush1.msra.mxu0 0.0
        %2046 = vmatprep.subr.mxu0 0.0
        %2047 = vmatpush1.msra.mxu0 0.0
        %2048 = vmatprep.subr.mxu0 0.0
        %2049 = vmatpush1.msra.mxu0 0.0
        %2050 = vmatprep.subr.mxu0 0.0
        %2051 = vmatpush1.msra.mxu0 0.0
        %2052 = vmatprep.subr.mxu0 0.0
        %2053 = vmatpush1.msra.mxu0 0.0
        %2054 = vmatprep.subr.mxu0 0.0
        %2055 = vmatpush1.msra.mxu0 0.0
        %2056 = vmatprep.subr.mxu0 0.0
        %2057 = vmatpush1.msra.mxu0 0.0
        %2058 = vmatprep.subr.mxu0 0.0
        %2059 = vmatpush1.msra.mxu0 0.0
        %2060 = vmatprep.mubr.f32.mxu0 0.0
        %2061 = vmatmul.mubr.f32.gmra.mrb[0].mxu0 %v1972
        %v2062 = vpop.f32.mrb[0].mxu0
        %v2063 = vadd.f32 %v1994, %v2062
        %v2064 = vpop.f32.mrb[0].mxu0
        %2065 = vdwg.mxu0
        %v2066 = vadd.f32 %v1852, %v2063
        %2067 = vst.msk [vmem:[%s727] sm:$0xff] %vm1855, %v2066
        %s2068 = sand.u32 %s373, 1
        %s2069 = scalar_lea.sflag [#allocation7], %s2068
        %s2070 = sand.u32 %s373, 1
        %s2071 = smul.addr %s2070, 8
        %s2072 = scalar_lea.vmem [#allocation28], %s2071
        %s2073 = sand.u32 %s401, 1
        %s2074 = scalar_lea.sflag [#allocation30], %s2073
        %s2075 = sand.u32 %s401, 1
        %s2076 = smul.addr %s2075, 32
        %s2077 = scalar_lea.vmem [#allocation29], %s2076
        // Predicated region
        $region137: #{tpu_custom_call.1} parent=75 // pred_check
          %p2078 = pneg %p383
        $region138: #{tpu_custom_call.1} parent=75 // pred_check_branch
          %2080 = sbr.rel (%p2078) target = $region140
        $region139: #{tpu_custom_call.1} parent=75 // pred_region
          %s2082 = ssub.s32 128, 128
          %2083 = vsyncadd %s2069, %s2082
          %s2084 = sadd.s32 %s50, %s49
          %s2085 = smul.addr %s2084, 128
          %s2086 = scalar_lea.hbm %s14, %s2085
          %s2088 = sshll.u32 %s2072, 4
          %s2089 = int_to_ptr.vmem [resolvable:$true] %s2088
          %2091 = dma.vmem_to_hbm [thread:$0]  %s2089, 128, %s2086, %s2069
        $region140: #{tpu_custom_call.1} parent=75 // pred_fallthru
          _
        // Predicated region
        $region141: #{tpu_custom_call.1} parent=75 // pred_check
          %p2092 = pneg %p411
        $region142: #{tpu_custom_call.1} parent=75 // pred_check_branch
          %2094 = sbr.rel (%p2092) target = $region144
        $region143: #{tpu_custom_call.1} parent=75 // pred_region
          %s2096 = ssub.s32 512, 512
          %2097 = vsyncadd %s2074, %s2096
          %s2098 = smul.addr %s49, 4
          %s2099 = sadd.s32 %s50, %s2098
          %s2100 = smul.addr %s2099, 128
          %s2101 = scalar_lea.hbm %s15, %s2100
          %s2102 = sshll.u32 %s2077, 4
          %s2103 = int_to_ptr.vmem [resolvable:$true] %s2102
          %2108 = dma.vmem_to_hbm [thread:$0]  %s2103, 512, %s2101, %s2074, 128, 128, 8
        $region144: #{tpu_custom_call.1} parent=75 // pred_fallthru
          _
      $region76: #{tpu_custom_call.1} parent=5 // pred_fallthru
        _
      %p2109 = scmp.le.s32.totalorder 2, %s40
      // Predicated region
      $region145: #{tpu_custom_call.1} parent=5 // pred_check
        %p2110 = pneg %p2109
      $region146: #{tpu_custom_call.1} parent=5 // pred_check_branch
        %2112 = sbr.rel (%p2110) target = $region148
      $region147: #{tpu_custom_call.1} parent=5 // pred_region
        %s2113 = ssub.s32 %s40, 2
        // Predicated region
        $region149: #{tpu_custom_call.1} parent=147 // pred_check
          %p2114 = pneg %p389
        $region150: #{tpu_custom_call.1} parent=147 // pred_check_branch
          %2116 = sbr.rel (%p2114) target = $region152
        $region151: #{tpu_custom_call.1} parent=147 // pred_region
          %s2117 = sand.u32 %s374, 1
          %s2118 = scalar_lea.sflag [#allocation7], %s2117
          %s2119 = sand.u32 %s374, 1
          %s2120 = smul.addr %s2119, 8
          %s2121 = scalar_lea.vmem [#allocation28], %s2120
          %2122 = dma.done %s2118, 128
        $region152: #{tpu_custom_call.1} parent=147 // pred_fallthru
          _
        // Predicated region
        $region153: #{tpu_custom_call.1} parent=147 // pred_check
          %p2123 = pneg %p417
        $region154: #{tpu_custom_call.1} parent=147 // pred_check_branch
          %2125 = sbr.rel (%p2123) target = $region156
        $region155: #{tpu_custom_call.1} parent=147 // pred_region
          %s2126 = sand.u32 %s402, 1
          %s2127 = scalar_lea.sflag [#allocation30], %s2126
          %s2128 = sand.u32 %s402, 1
          %s2129 = smul.addr %s2128, 32
          %s2130 = scalar_lea.vmem [#allocation29], %s2129
          %2131 = dma.done %s2127, 512
        $region156: #{tpu_custom_call.1} parent=147 // pred_fallthru
          _
      $region148: #{tpu_custom_call.1} parent=5 // pred_fallthru
        _
    $region6: #{tpu_custom_call.1} parent=1 // loop_footer
      %s44 = sadd.s32 1, %s40
    $region7: #{tpu_custom_call.1} parent=1 // loop_footer_branch
      %39 = sbr.rel target = $region3
    $region8: #{tpu_custom_call.1} parent=1 // loop_exit
      _
    %2132 = vsyncpa [#allocation6], 1
    %s2133 = scalar_lea.sflag [#allocation6], 1
    %2134 = vsyncpa %s2133, 1
    %2135 = vsyncpa [#allocation9], 1
    %s2136 = scalar_lea.sflag [#allocation9], 1
    %2137 = vsyncpa %s2136, 1
    %2138 = vsyncpa [#allocation12], 1
    %2139 = vsyncpa [#allocation15], 1
    %2140 = vsyncpa [#allocation18], 1
    %2141 = vsyncpa [#allocation21], 1
    %2142 = vsyncpa [#allocation24], 1
    %2143 = vsyncpa [#allocation27], 1
    %2144 = vsyncpa [#allocation7], 1
    %s2145 = scalar_lea.sflag [#allocation7], 1
    %2146 = vsyncpa %s2145, 1
    %2147 = vsyncpa [#allocation30], 1
    %s2148 = scalar_lea.sflag [#allocation30], 1
    %2149 = vsyncpa %s2148, 1

</llo_original>
